<compile_context>
chip_gen: v7x
topology: tpu7x:2x2x1
jax: 0.10.0
libtpu: 0.0.40
codegen_flags: <defaults>
</compile_context>

<pallas_src>
import math
import numpy as np
import jax
import jax.numpy as jnp
from jax.experimental import pallas as pl
from jax.experimental.pallas import tpu as pltpu


# ----------------------------- fused Pallas kernel ---------------------------

def _zero_map(ndim):
    return lambda i: (0,) * ndim


def _make_fused_kernel(num_cmp, prop_step):
    """Builds the fused forward kernel.

    Ref order: xr, xi, lin_w, (cmp1_0, cmp2_0, ..., cmp1_{n-1}, cmp2_{n-1}),
               rec_two, rec_three, worm_row, thr_row, recidx_row, yr_out, yi_out.
    """

    def kernel(*refs):
        xr_ref, xi_ref, lin_ref = refs[0:3]
        pos = 3
        cmp_refs = []
        for _ in range(num_cmp):
            cmp_refs.append((refs[pos], refs[pos + 1]))
            pos += 2
        rec2_ref, rec3_ref, worm_ref, thr_ref, recidx_ref = refs[pos:pos + 5]
        pos += 5
        yr_ref, yi_ref = refs[pos:pos + 2]

        xr = xr_ref[...]
        xi = xi_ref[...]
        lin_w = lin_ref[...]
        worm = worm_ref[...]        # (1, SIZE) worm index (imaginary tag)
        thr = thr_ref[...]          # (1, SIZE) negated thresholds
        recidx = recidx_ref[...]    # (1, SIZE) recovery worm index

        def real_matmul(ar, ai, w):
            # complex matmul with purely-real weight (wi == 0) and zero bias:
            # yr = ar @ w, yi = ai @ w  -> no zero-weight MXU work, no bias DMA.
            return (jnp.dot(ar, w, preferred_element_type=jnp.float32),
                    jnp.dot(ai, w, preferred_element_type=jnp.float32))

        def stage_one_threshold(ar, ai):
            # TODO(synk): exact ModuleStageOne source not provided; assumed relu(real + threshold), imag passthrough.
            return jnp.maximum(ar + thr, 0.0), ai

        for _ in range(prop_step - 1):
            # StageOne ComplexLinear (real weight, zero imaginary weight / bias).
            xr, xi = real_matmul(xr, xi, lin_w)
            # x = x + i * worm_index (pure-imaginary tag broadcast over batch).
            xi = xi + worm
            xr, xi = stage_one_threshold(xr, xi)
            # StageTwo comparison layers.
            for (w1_ref, w2_ref) in cmp_refs:
                xr, xi = real_matmul(xr, xi, w1_ref[...])
                # TODO(synk): exact ModuleStageTwo source not provided; assumed gate the complex value by (real > 0).
                keep = xr > 0.0
                xr = jnp.where(keep, xr, 0.0)
                xi = jnp.where(keep, xi, 0.0)
                xr, xi = real_matmul(xr, xi, w2_ref[...])
            # RecoveryOne: weight is -i * I  =>  (re, im) <- (im, -re); no matmul needed.
            xr, xi = xi, -xr
            # ComplexReLU.
            xr = jnp.maximum(xr, 0.0)
            xi = jnp.maximum(xi, 0.0)
            # RecoveryTwo.
            xr, xi = real_matmul(xr, xi, rec2_ref[...])
            # TODO(synk): exact ModuleRecover source not provided; assumed real -= worm_index, imag passthrough.
            xr = xr - recidx
            # RecoveryThree.
            xr, xi = real_matmul(xr, xi, rec3_ref[...])
            xr = xr - recidx
        # Final StageOne + threshold + complex sigmoid.
        xr, xi = real_matmul(xr, xi, lin_w)
        xr, xi = stage_one_threshold(xr, xi)
        yr_ref[...] = jax.nn.sigmoid(xr)
        yi_ref[...] = jax.nn.sigmoid(xi)

    return kernel


# --------------------------- constant matrices --------------------------------

def build_constants(num_nodes, num_worms, adj_np, thr_np):
    size = num_nodes * num_worms
    c = {}

    # StageOne: kron(adjacency, I_W) with diagonal forced to 1000 (real part only).
    s1 = np.kron(adj_np.astype(np.float64), np.eye(num_worms)).astype(np.float32)
    np.fill_diagonal(s1, 1000.0)
    c["stage_one_mask"] = s1                                   # (out, in)

    # StageTwo comparison layers (loops use range(NumNodes), as in the source).
    cmp1, cmp2 = [], []
    for step in range(int(math.log2(num_worms))):
        n = size // (2 ** step)
        w1 = np.eye(n, dtype=np.float32)
        for i in range(num_nodes):
            w1[2 * i + 1, 2 * i] = -1.0
        w2 = np.zeros((n, n // 2), dtype=np.float32)
        for i in range(num_nodes):
            w2[2 * i, i] = 1.0
            w2[2 * i + 1, i] = 1.0
        cmp1.append(jnp.asarray(w1))
        cmp2.append(jnp.asarray(w2))
    c["cmp1"], c["cmp2"] = cmp1, cmp2

    # RecoveryOne: purely imaginary -I of size NumNodes (used only by the JAX reference;
    # the Pallas kernel uses the algebraic identity instead).
    c["rec_one_imag"] = jnp.asarray(-np.eye(num_nodes, dtype=np.float32))

    # RecoveryTwo: (NumNodes, size), node value broadcast to its worm slots.
    r2 = np.zeros((num_nodes, size), dtype=np.float32)
    for i in range(num_nodes):
        for j in range(num_worms):
            r2[i, i * num_worms + j] = 1.0
    c["rec_two"] = jnp.asarray(r2)

    # RecoveryThree: block-diagonal +/-1 per node.
    r3 = np.zeros((size, size), dtype=np.float32)
    for i in range(num_nodes):
        for j in range(num_worms):
            for k in range(num_worms):
                r3[i * num_worms + j, i * num_worms + k] = 1.0 if j <= k else -1.0
    c["rec_three"] = jnp.asarray(r3)

    # Worm index rows (j+1 pattern) and negated thresholds, as (1, size) rows.
    idx = np.zeros((1, size), dtype=np.float32)
    for i in range(num_nodes):
        for j in range(num_worms):
            idx[0, i * num_worms + j] = j + 1
    c["worm_index_row"] = jnp.asarray(idx)   # StageOneWormsIndex (imaginary tag)
    c["rec_index_row"] = jnp.asarray(idx)    # RecoveryWormsIndex_Tensor (real)

    c["threshold_row"] = jnp.asarray(-thr_np.reshape(1, size).astype(np.float32))
    return c


# ------------------------------ the model -------------------------------------

class ComplexNNPallas:
    def __init__(self, num_nodes, num_worms, adj_np, thr_np, propagation_step, key):
        self.N, self.W = num_nodes, num_worms
        self.size = num_nodes * num_worms
        self.P = propagation_step
        self.num_cmp = int(math.log2(num_worms))
        self.c = build_constants(num_nodes, num_worms, adj_np, thr_np)

        # ComplexLinear(StageOne): fc_r.weight ~ U(0,1) * StageOneMatrix.real,
        # fc_i.weight = 0.  Biases set to 0 deterministically (synthetic init).
        w = jax.random.uniform(key, (self.size, self.size), jnp.float32, 0.0, 1.0)
        wr = w * jnp.asarray(self.c["stage_one_mask"])        # (out, in)
        self.lin_wr = wr.T                                     # (in, out) for x @ W

        self._kernel = _make_fused_kernel(self.num_cmp, self.P)

    # ---- fused Pallas forward: one pallas_call for the whole pass ----
    def forward(self, xr, xi):
        c = self.c
        B = xr.shape[0]
        weights = [self.lin_wr]
        for w1, w2 in zip(c["cmp1"], c["cmp2"]):
            weights += [w1, w2]
        weights += [c["rec_two"], c["rec_three"],
                    c["worm_index_row"], c["threshold_row"], c["rec_index_row"]]
        ins = (xr, xi, *weights)

        out_sh = (B, self.size)
        return pl.pallas_call(
            self._kernel,
            grid=(1,),
            in_specs=[pl.BlockSpec(a.shape, _zero_map(a.ndim)) for a in ins],
            out_specs=(pl.BlockSpec(out_sh, _zero_map(2)),
                       pl.BlockSpec(out_sh, _zero_map(2))),
            out_shape=(jax.ShapeDtypeStruct(out_sh, jnp.float32),
                       jax.ShapeDtypeStruct(out_sh, jnp.float32)),
            compiler_params=pltpu.CompilerParams(
                dimension_semantics=("arbitrary",)),
        )(*ins)

    # ---- plain-JAX reference with identical (assumed) semantics ----
    def forward_ref(self, xr, xi):
        c = self.c

        def cmat(ar, ai, wr, wi):
            return ar @ wr - ai @ wi, ar @ wi + ai @ wr

        for _ in range(self.P - 1):
            xr, xi = cmat(xr, xi, self.lin_wr, jnp.zeros_like(self.lin_wr))
            xi = xi + c["worm_index_row"]
            xr, xi = jnp.maximum(xr + c["threshold_row"], 0.0), xi
            for step in range(self.num_cmp):
                w1 = c["cmp1"][step]
                xr, xi = cmat(xr, xi, w1, jnp.zeros_like(w1))
                mask = xr > 0.0
                xr, xi = jnp.where(mask, xr, 0.0), jnp.where(mask, xi, 0.0)
                w2 = c["cmp2"][step]
                xr, xi = cmat(xr, xi, w2, jnp.zeros_like(w2))
            n = xr.shape[1]
            xr, xi = cmat(xr, xi, jnp.zeros((n, n), jnp.float32), c["rec_one_imag"])
            xr, xi = jnp.maximum(xr, 0.0), jnp.maximum(xi, 0.0)
            xr, xi = cmat(xr, xi, c["rec_two"], jnp.zeros_like(c["rec_two"]))
            xr = xr - c["rec_index_row"]
            xr, xi = cmat(xr, xi, c["rec_three"], jnp.zeros_like(c["rec_three"]))
            xr = xr - c["rec_index_row"]
        xr, xi = cmat(xr, xi, self.lin_wr, jnp.zeros_like(self.lin_wr))
        xr, xi = jnp.maximum(xr + c["threshold_row"], 0.0), xi
        return jax.nn.sigmoid(xr), jax.nn.sigmoid(xi)


# --------------------------------- main ----------------------------------------

if __name__ == "__main__":
    NumNodes, NumWorms, BATCH, PROP = 4, 4, 2, 2
    SIZE = NumNodes * NumWorms

    # Deterministic in-script "graph": a 4-node ring with per-(node, worm) thresholds.
    adj = np.zeros((NumNodes, NumNodes), dtype=np.float32)
    for i in range(NumNodes):
        adj[i, (i + 1) % NumNodes] = 1.0
        adj[(i + 1) % NumNodes, i] = 1.0
    thr = np.array([[0.1 * (i + 1) + 0.05 * (j + 1) for j in range(NumWorms)]
                    for i in range(NumNodes)], dtype=np.float32)

    key = jax.random.PRNGKey(0)
    k_w, k_r, k_i = jax.random.split(key, 3)
    model = ComplexNNPallas(NumNodes, NumWorms, adj, thr, PROP, k_w)

    x_real = jax.random.normal(k_r, (BATCH, SIZE), jnp.float32)
    x_imag = jax.random.normal(k_i, (BATCH, SIZE), jnp.float32)

    out_r, out_i = jax.jit(model.forward)(x_real, x_imag)
    jax.block_until_ready((out_r, out_i))

    ref_r, ref_i = model.forward_ref(x_real, x_imag)
    np.testing.assert_allclose(np.asarray(out_r), np.asarray(ref_r),
                               atol=1e-3, rtol=1e-3)
    np.testing.assert_allclose(np.asarray(out_i), np.asarray(ref_i),
                               atol=1e-3, rtol=1e-3)
    print("KERNEL_OK")
</pallas_src>

<mosaic_0001>
module attributes {stable_mosaic.version = 11 : i64} {
  func.func @kernel(%arg0: i32, %arg1: memref<2x16xf32, #tpu.memory_space<vmem>>, %arg2: memref<2x16xf32, #tpu.memory_space<vmem>>, %arg3: memref<16x16xf32, #tpu.memory_space<vmem>>, %arg4: memref<16x16xf32, #tpu.memory_space<vmem>>, %arg5: memref<16x8xf32, #tpu.memory_space<vmem>>, %arg6: memref<8x8xf32, #tpu.memory_space<vmem>>, %arg7: memref<8x4xf32, #tpu.memory_space<vmem>>, %arg8: memref<4x16xf32, #tpu.memory_space<vmem>>, %arg9: memref<16x16xf32, #tpu.memory_space<vmem>>, %arg10: memref<1x16xf32, #tpu.memory_space<vmem>>, %arg11: memref<1x16xf32, #tpu.memory_space<vmem>>, %arg12: memref<1x16xf32, #tpu.memory_space<vmem>>, %arg13: memref<2x16xf32, #tpu.memory_space<vmem>>, %arg14: memref<2x16xf32, #tpu.memory_space<vmem>>) attributes {dimension_semantics = [#tpu.dimension_semantics<arbitrary>], iteration_bounds = array<i64: 1>, scalar_prefetch = 0 : i64, scratch_operands = 0 : i64, tpu.core_type = #tpu.core_type<tc>, window_params = [{pipeline_mode = #tpu.pipeline_mode<synchronous>, transform_indices = @transform_0, window_bounds = array<i64: 2, 16>}, {pipeline_mode = #tpu.pipeline_mode<synchronous>, transform_indices = @transform_1, window_bounds = array<i64: 2, 16>}, {pipeline_mode = #tpu.pipeline_mode<synchronous>, transform_indices = @transform_2, window_bounds = array<i64: 16, 16>}, {pipeline_mode = #tpu.pipeline_mode<synchronous>, transform_indices = @transform_3, window_bounds = array<i64: 16, 16>}, {pipeline_mode = #tpu.pipeline_mode<synchronous>, transform_indices = @transform_4, window_bounds = array<i64: 16, 8>}, {pipeline_mode = #tpu.pipeline_mode<synchronous>, transform_indices = @transform_5, window_bounds = array<i64: 8, 8>}, {pipeline_mode = #tpu.pipeline_mode<synchronous>, transform_indices = @transform_6, window_bounds = array<i64: 8, 4>}, {pipeline_mode = #tpu.pipeline_mode<synchronous>, transform_indices = @transform_7, window_bounds = array<i64: 4, 16>}, {pipeline_mode = #tpu.pipeline_mode<synchronous>, transform_indices = @transform_8, window_bounds = array<i64: 16, 16>}, {pipeline_mode = #tpu.pipeline_mode<synchronous>, transform_indices = @transform_9, window_bounds = array<i64: 1, 16>}, {pipeline_mode = #tpu.pipeline_mode<synchronous>, transform_indices = @transform_10, window_bounds = array<i64: 1, 16>}, {pipeline_mode = #tpu.pipeline_mode<synchronous>, transform_indices = @transform_11, window_bounds = array<i64: 1, 16>}, {pipeline_mode = #tpu.pipeline_mode<synchronous>, transform_indices = @transform_12, window_bounds = array<i64: 2, 16>}, {pipeline_mode = #tpu.pipeline_mode<synchronous>, transform_indices = @transform_13, window_bounds = array<i64: 2, 16>}]} {
    %c0 = arith.constant 0 : index
    %c0_0 = arith.constant 0 : index
    %0 = vector.load %arg1[%c0, %c0_0] : memref<2x16xf32, #tpu.memory_space<vmem>>, vector<2x16xf32>
    %c0_1 = arith.constant 0 : index
    %c0_2 = arith.constant 0 : index
    %1 = vector.load %arg2[%c0_1, %c0_2] : memref<2x16xf32, #tpu.memory_space<vmem>>, vector<2x16xf32>
    %c0_3 = arith.constant 0 : index
    %c0_4 = arith.constant 0 : index
    %2 = vector.load %arg3[%c0_3, %c0_4] : memref<16x16xf32, #tpu.memory_space<vmem>>, vector<16x16xf32>
    %c0_5 = arith.constant 0 : index
    %c0_6 = arith.constant 0 : index
    %3 = vector.load %arg10[%c0_5, %c0_6] : memref<1x16xf32, #tpu.memory_space<vmem>>, vector<1x16xf32>
    %c0_7 = arith.constant 0 : index
    %c0_8 = arith.constant 0 : index
    %4 = vector.load %arg11[%c0_7, %c0_8] : memref<1x16xf32, #tpu.memory_space<vmem>>, vector<1x16xf32>
    %c0_9 = arith.constant 0 : index
    %c0_10 = arith.constant 0 : index
    %5 = vector.load %arg12[%c0_9, %c0_10] : memref<1x16xf32, #tpu.memory_space<vmem>>, vector<1x16xf32>
    %cst = arith.constant dense<0.000000e+00> : vector<2x16xf32>
    %6 = tpu.matmul %0, %2, %cst {dimension_numbers = #tpu.dot_dimension_numbers<[1], [0], [0], [1], [0, 0, 1, 1], [], []>} : vector<2x16xf32>, vector<16x16xf32>, vector<2x16xf32> -> vector<2x16xf32>
    %cst_11 = arith.constant dense<0.000000e+00> : vector<2x16xf32>
    %7 = tpu.matmul %1, %2, %cst_11 {dimension_numbers = #tpu.dot_dimension_numbers<[1], [0], [0], [1], [0, 0, 1, 1], [], []>} : vector<2x16xf32>, vector<16x16xf32>, vector<2x16xf32> -> vector<2x16xf32>
    %8 = vector.broadcast %3 : vector<1x16xf32> to vector<2x16xf32>
    %9 = arith.addf %7, %8 : vector<2x16xf32>
    %10 = vector.broadcast %4 : vector<1x16xf32> to vector<2x16xf32>
    %11 = arith.addf %6, %10 : vector<2x16xf32>
    %cst_12 = arith.constant 0.000000e+00 : f32
    %12 = vector.broadcast %cst_12 : f32 to vector<2x16xf32>
    %13 = arith.maximumf %11, %12 : vector<2x16xf32>
    %c0_13 = arith.constant 0 : index
    %c0_14 = arith.constant 0 : index
    %14 = vector.load %arg4[%c0_13, %c0_14] : memref<16x16xf32, #tpu.memory_space<vmem>>, vector<16x16xf32>
    %cst_15 = arith.constant dense<0.000000e+00> : vector<2x16xf32>
    %15 = tpu.matmul %13, %14, %cst_15 {dimension_numbers = #tpu.dot_dimension_numbers<[1], [0], [0], [1], [0, 0, 1, 1], [], []>} : vector<2x16xf32>, vector<16x16xf32>, vector<2x16xf32> -> vector<2x16xf32>
    %cst_16 = arith.constant dense<0.000000e+00> : vector<2x16xf32>
    %16 = tpu.matmul %9, %14, %cst_16 {dimension_numbers = #tpu.dot_dimension_numbers<[1], [0], [0], [1], [0, 0, 1, 1], [], []>} : vector<2x16xf32>, vector<16x16xf32>, vector<2x16xf32> -> vector<2x16xf32>
    %cst_17 = arith.constant 0.000000e+00 : f32
    %17 = vector.broadcast %cst_17 : f32 to vector<2x16xf32>
    %18 = arith.cmpf ogt, %15, %17 : vector<2x16xf32>
    %cst_18 = arith.constant 0.000000e+00 : f32
    %19 = vector.broadcast %cst_18 : f32 to vector<2x16xf32>
    %20 = arith.select %18, %15, %19 : vector<2x16xi1>, vector<2x16xf32>
    %cst_19 = arith.constant 0.000000e+00 : f32
    %21 = vector.broadcast %cst_19 : f32 to vector<2x16xf32>
    %22 = arith.select %18, %16, %21 : vector<2x16xi1>, vector<2x16xf32>
    %c0_20 = arith.constant 0 : index
    %c0_21 = arith.constant 0 : index
    %23 = vector.load %arg5[%c0_20, %c0_21] : memref<16x8xf32, #tpu.memory_space<vmem>>, vector<16x8xf32>
    %cst_22 = arith.constant dense<0.000000e+00> : vector<2x8xf32>
    %24 = tpu.matmul %20, %23, %cst_22 {dimension_numbers = #tpu.dot_dimension_numbers<[1], [0], [0], [1], [0, 0, 1, 1], [], []>} : vector<2x16xf32>, vector<16x8xf32>, vector<2x8xf32> -> vector<2x8xf32>
    %cst_23 = arith.constant dense<0.000000e+00> : vector<2x8xf32>
    %25 = tpu.matmul %22, %23, %cst_23 {dimension_numbers = #tpu.dot_dimension_numbers<[1], [0], [0], [1], [0, 0, 1, 1], [], []>} : vector<2x16xf32>, vector<16x8xf32>, vector<2x8xf32> -> vector<2x8xf32>
    %c0_24 = arith.constant 0 : index
    %c0_25 = arith.constant 0 : index
    %26 = vector.load %arg6[%c0_24, %c0_25] : memref<8x8xf32, #tpu.memory_space<vmem>>, vector<8x8xf32>
    %cst_26 = arith.constant dense<0.000000e+00> : vector<2x8xf32>
    %27 = tpu.matmul %24, %26, %cst_26 {dimension_numbers = #tpu.dot_dimension_numbers<[1], [0], [0], [1], [0, 0, 1, 1], [], []>} : vector<2x8xf32>, vector<8x8xf32>, vector<2x8xf32> -> vector<2x8xf32>
    %cst_27 = arith.constant dense<0.000000e+00> : vector<2x8xf32>
    %28 = tpu.matmul %25, %26, %cst_27 {dimension_numbers = #tpu.dot_dimension_numbers<[1], [0], [0], [1], [0, 0, 1, 1], [], []>} : vector<2x8xf32>, vector<8x8xf32>, vector<2x8xf32> -> vector<2x8xf32>
    %cst_28 = arith.constant 0.000000e+00 : f32
    %29 = vector.broadcast %cst_28 : f32 to vector<2x8xf32>
    %30 = arith.cmpf ogt, %27, %29 : vector<2x8xf32>
    %cst_29 = arith.constant 0.000000e+00 : f32
    %31 = vector.broadcast %cst_29 : f32 to vector<2x8xf32>
    %32 = arith.select %30, %27, %31 : vector<2x8xi1>, vector<2x8xf32>
    %cst_30 = arith.constant 0.000000e+00 : f32
    %33 = vector.broadcast %cst_30 : f32 to vector<2x8xf32>
    %34 = arith.select %30, %28, %33 : vector<2x8xi1>, vector<2x8xf32>
    %c0_31 = arith.constant 0 : index
    %c0_32 = arith.constant 0 : index
    %35 = vector.load %arg7[%c0_31, %c0_32] : memref<8x4xf32, #tpu.memory_space<vmem>>, vector<8x4xf32>
    %cst_33 = arith.constant dense<0.000000e+00> : vector<2x4xf32>
    %36 = tpu.matmul %32, %35, %cst_33 {dimension_numbers = #tpu.dot_dimension_numbers<[1], [0], [0], [1], [0, 0, 1, 1], [], []>} : vector<2x8xf32>, vector<8x4xf32>, vector<2x4xf32> -> vector<2x4xf32>
    %cst_34 = arith.constant dense<0.000000e+00> : vector<2x4xf32>
    %37 = tpu.matmul %34, %35, %cst_34 {dimension_numbers = #tpu.dot_dimension_numbers<[1], [0], [0], [1], [0, 0, 1, 1], [], []>} : vector<2x8xf32>, vector<8x4xf32>, vector<2x4xf32> -> vector<2x4xf32>
    %cst_35 = arith.constant 0.000000e+00 : f32
    %38 = vector.broadcast %cst_35 : f32 to vector<2x4xf32>
    %39 = arith.subf %38, %36 : vector<2x4xf32>
    %cst_36 = arith.constant 0.000000e+00 : f32
    %40 = vector.broadcast %cst_36 : f32 to vector<2x4xf32>
    %41 = arith.maximumf %37, %40 : vector<2x4xf32>
    %cst_37 = arith.constant 0.000000e+00 : f32
    %42 = vector.broadcast %cst_37 : f32 to vector<2x4xf32>
    %43 = arith.maximumf %39, %42 : vector<2x4xf32>
    %c0_38 = arith.constant 0 : index
    %c0_39 = arith.constant 0 : index
    %44 = vector.load %arg8[%c0_38, %c0_39] : memref<4x16xf32, #tpu.memory_space<vmem>>, vector<4x16xf32>
    %cst_40 = arith.constant dense<0.000000e+00> : vector<2x16xf32>
    %45 = tpu.matmul %41, %44, %cst_40 {dimension_numbers = #tpu.dot_dimension_numbers<[1], [0], [0], [1], [0, 0, 1, 1], [], []>} : vector<2x4xf32>, vector<4x16xf32>, vector<2x16xf32> -> vector<2x16xf32>
    %cst_41 = arith.constant dense<0.000000e+00> : vector<2x16xf32>
    %46 = tpu.matmul %43, %44, %cst_41 {dimension_numbers = #tpu.dot_dimension_numbers<[1], [0], [0], [1], [0, 0, 1, 1], [], []>} : vector<2x4xf32>, vector<4x16xf32>, vector<2x16xf32> -> vector<2x16xf32>
    %47 = vector.broadcast %5 : vector<1x16xf32> to vector<2x16xf32>
    %48 = arith.subf %45, %47 : vector<2x16xf32>
    %c0_42 = arith.constant 0 : index
    %c0_43 = arith.constant 0 : index
    %49 = vector.load %arg9[%c0_42, %c0_43] : memref<16x16xf32, #tpu.memory_space<vmem>>, vector<16x16xf32>
    %cst_44 = arith.constant dense<0.000000e+00> : vector<2x16xf32>
    %50 = tpu.matmul %48, %49, %cst_44 {dimension_numbers = #tpu.dot_dimension_numbers<[1], [0], [0], [1], [0, 0, 1, 1], [], []>} : vector<2x16xf32>, vector<16x16xf32>, vector<2x16xf32> -> vector<2x16xf32>
    %cst_45 = arith.constant dense<0.000000e+00> : vector<2x16xf32>
    %51 = tpu.matmul %46, %49, %cst_45 {dimension_numbers = #tpu.dot_dimension_numbers<[1], [0], [0], [1], [0, 0, 1, 1], [], []>} : vector<2x16xf32>, vector<16x16xf32>, vector<2x16xf32> -> vector<2x16xf32>
    %52 = vector.broadcast %5 : vector<1x16xf32> to vector<2x16xf32>
    %53 = arith.subf %50, %52 : vector<2x16xf32>
    %cst_46 = arith.constant dense<0.000000e+00> : vector<2x16xf32>
    %54 = tpu.matmul %53, %2, %cst_46 {dimension_numbers = #tpu.dot_dimension_numbers<[1], [0], [0], [1], [0, 0, 1, 1], [], []>} : vector<2x16xf32>, vector<16x16xf32>, vector<2x16xf32> -> vector<2x16xf32>
    %cst_47 = arith.constant dense<0.000000e+00> : vector<2x16xf32>
    %55 = tpu.matmul %51, %2, %cst_47 {dimension_numbers = #tpu.dot_dimension_numbers<[1], [0], [0], [1], [0, 0, 1, 1], [], []>} : vector<2x16xf32>, vector<16x16xf32>, vector<2x16xf32> -> vector<2x16xf32>
    %56 = vector.broadcast %4 : vector<1x16xf32> to vector<2x16xf32>
    %57 = arith.addf %54, %56 : vector<2x16xf32>
    %cst_48 = arith.constant 0.000000e+00 : f32
    %58 = vector.broadcast %cst_48 : f32 to vector<2x16xf32>
    %59 = arith.maximumf %57, %58 : vector<2x16xf32>
    %60 = arith.negf %59 : vector<2x16xf32>
    %61 = math.exp %60 : vector<2x16xf32>
    %cst_49 = arith.constant 1.000000e+00 : f32
    %62 = vector.broadcast %cst_49 : f32 to vector<2x16xf32>
    %63 = arith.addf %62, %61 : vector<2x16xf32>
    %64 = arith.divf %62, %63 : vector<2x16xf32>
    %c0_50 = arith.constant 0 : index
    %c0_51 = arith.constant 0 : index
    %65 = vector.load %arg13[%c0_50, %c0_51] : memref<2x16xf32, #tpu.memory_space<vmem>>, vector<2x16xf32>
    tpu.vector_store %arg13[%c0_50, %c0_51], %64 {strides = array<i32>} : memref<2x16xf32, #tpu.memory_space<vmem>>, vector<2x16xf32>,
    %66 = arith.negf %55 : vector<2x16xf32>
    %67 = math.exp %66 : vector<2x16xf32>
    %cst_52 = arith.constant 1.000000e+00 : f32
    %68 = vector.broadcast %cst_52 : f32 to vector<2x16xf32>
    %69 = arith.addf %68, %67 : vector<2x16xf32>
    %70 = arith.divf %68, %69 : vector<2x16xf32>
    %c0_53 = arith.constant 0 : index
    %c0_54 = arith.constant 0 : index
    %71 = vector.load %arg14[%c0_53, %c0_54] : memref<2x16xf32, #tpu.memory_space<vmem>>, vector<2x16xf32>
    tpu.vector_store %arg14[%c0_53, %c0_54], %70 {strides = array<i32>} : memref<2x16xf32, #tpu.memory_space<vmem>>, vector<2x16xf32>,
    return
  }
  func.func @transform_0(%arg0: i32) -> (i32, i32) {
    %c0_i32 = arith.constant 0 : i32
    %c0_i32_0 = arith.constant 0 : i32
    %c0_i32_1 = arith.constant 0 : i32
    return %c0_i32, %c0_i32_0 : i32, i32
  }
  func.func @transform_1(%arg0: i32) -> (i32, i32) {
    %c0_i32 = arith.constant 0 : i32
    %c0_i32_0 = arith.constant 0 : i32
    %c0_i32_1 = arith.constant 0 : i32
    return %c0_i32, %c0_i32_0 : i32, i32
  }
  func.func @transform_2(%arg0: i32) -> (i32, i32) {
    %c0_i32 = arith.constant 0 : i32
    %c0_i32_0 = arith.constant 0 : i32
    %c0_i32_1 = arith.constant 0 : i32
    return %c0_i32, %c0_i32_0 : i32, i32
  }
  func.func @transform_3(%arg0: i32) -> (i32, i32) {
    %c0_i32 = arith.constant 0 : i32
    %c0_i32_0 = arith.constant 0 : i32
    %c0_i32_1 = arith.constant 0 : i32
    return %c0_i32, %c0_i32_0 : i32, i32
  }
  func.func @transform_4(%arg0: i32) -> (i32, i32) {
    %c0_i32 = arith.constant 0 : i32
    %c0_i32_0 = arith.constant 0 : i32
    %c0_i32_1 = arith.constant 0 : i32
    return %c0_i32, %c0_i32_0 : i32, i32
  }
  func.func @transform_5(%arg0: i32) -> (i32, i32) {
    %c0_i32 = arith.constant 0 : i32
    %c0_i32_0 = arith.constant 0 : i32
    %c0_i32_1 = arith.constant 0 : i32
    return %c0_i32, %c0_i32_0 : i32, i32
  }
  func.func @transform_6(%arg0: i32) -> (i32, i32) {
    %c0_i32 = arith.constant 0 : i32
    %c0_i32_0 = arith.constant 0 : i32
    %c0_i32_1 = arith.constant 0 : i32
    return %c0_i32, %c0_i32_0 : i32, i32
  }
  func.func @transform_7(%arg0: i32) -> (i32, i32) {
    %c0_i32 = arith.constant 0 : i32
    %c0_i32_0 = arith.constant 0 : i32
    %c0_i32_1 = arith.constant 0 : i32
    return %c0_i32, %c0_i32_0 : i32, i32
  }
  func.func @transform_8(%arg0: i32) -> (i32, i32) {
    %c0_i32 = arith.constant 0 : i32
    %c0_i32_0 = arith.constant 0 : i32
    %c0_i32_1 = arith.constant 0 : i32
    return %c0_i32, %c0_i32_0 : i32, i32
  }
  func.func @transform_9(%arg0: i32) -> (i32, i32) {
    %c0_i32 = arith.constant 0 : i32
    %c0_i32_0 = arith.constant 0 : i32
    %c0_i32_1 = arith.constant 0 : i32
    return %c0_i32, %c0_i32_0 : i32, i32
  }
  func.func @transform_10(%arg0: i32) -> (i32, i32) {
    %c0_i32 = arith.constant 0 : i32
    %c0_i32_0 = arith.constant 0 : i32
    %c0_i32_1 = arith.constant 0 : i32
    return %c0_i32, %c0_i32_0 : i32, i32
  }
  func.func @transform_11(%arg0: i32) -> (i32, i32) {
    %c0_i32 = arith.constant 0 : i32
    %c0_i32_0 = arith.constant 0 : i32
    %c0_i32_1 = arith.constant 0 : i32
    return %c0_i32, %c0_i32_0 : i32, i32
  }
  func.func @transform_12(%arg0: i32) -> (i32, i32) {
    %c0_i32 = arith.constant 0 : i32
    %c0_i32_0 = arith.constant 0 : i32
    %c0_i32_1 = arith.constant 0 : i32
    return %c0_i32, %c0_i32_0 : i32, i32
  }
  func.func @transform_13(%arg0: i32) -> (i32, i32) {
    %c0_i32 = arith.constant 0 : i32
    %c0_i32_0 = arith.constant 0 : i32
    %c0_i32_1 = arith.constant 0 : i32
    return %c0_i32, %c0_i32_0 : i32, i32
  }
}

</mosaic_0001>

<llo_original>
// kernel: forward.1
$region0: #{forward.1}
  #allocation0 [shape = 'u32[]', space=smem, size = 0x4, offset = 0x4, fixed_abs, tag = 'smem constant byte address 0x4 - core index']
  #allocation1 [shape = 'u32[144,128]{1,0:T(1,128)}', space=vmem, size = 0x12000, scoped, tag = 'internal scratch']
  %s0 = inlined_call_operand.hbm [shape: f32[2,16], index: 0, kind: input, shape index: {}]
  %s1 = inlined_call_operand.hbm [shape: f32[2,16], index: 1, kind: input, shape index: {}]
  %s2 = inlined_call_operand.hbm [shape: f32[16,16], index: 2, kind: input, shape index: {}]
  %s3 = inlined_call_operand.hbm [shape: f32[16,16], index: 3, kind: input, shape index: {}]
  %s4 = inlined_call_operand.hbm [shape: f32[16,8], index: 4, kind: input, shape index: {}]
  %s5 = inlined_call_operand.hbm [shape: f32[8,8], index: 5, kind: input, shape index: {}]
  %s6 = inlined_call_operand.vmem [shape: f32[8,4], index: 6, kind: input, shape index: {}]
  %s7 = inlined_call_operand.vmem [shape: f32[4,16], index: 7, kind: input, shape index: {}]
  %s8 = inlined_call_operand.vmem [shape: f32[16,16], index: 8, kind: input, shape index: {}]
  %s9 = inlined_call_operand.vmem [shape: f32[1,16], index: 9, kind: input, shape index: {}, may-alias: {9,11}]
  %s10 = inlined_call_operand.vmem [shape: f32[1,16], index: 10, kind: input, shape index: {}]
  %s11 = inlined_call_operand.vmem [shape: f32[1,16], index: 11, kind: input, shape index: {}, may-alias: {9,11}]
  %s12 = inlined_call_operand.hbm [shape: f32[2,16], index: 12, kind: output, shape index: {0}]
  %s13 = inlined_call_operand.hbm [shape: f32[2,16], index: 13, kind: output, shape index: {1}]
  %14 = xla_tuple %s12, %s13
  %s15 = sld [smem:[#allocation0]]
  $region90: #{forward.1} parent=0
    _
  %s17 = ssub.s32 1, %s15
  %s18 = scalar_select 0, %s17, %s15
  $region1: #{forward.1} parent=0
    #allocation2 [shape = 'u8[1024]{0}', space=vmem, size = 0x400, scoped, tag = 'input window, operand 0, single buffered']
    #allocation3 [shape = 's32[1]{0}', space=sflag, size = 0x4, scoped, tag = 'scoped memory for forward.1']
    #allocation4 [shape = 's32[1]{0}', space=sflag, size = 0x4, scoped, tag = 'scoped memory for forward.1']
    #allocation5 [shape = 'u8[1024]{0}', space=vmem, size = 0x400, scoped, tag = 'input window, operand 1, single buffered']
    #allocation6 [shape = 's32[1]{0}', space=sflag, size = 0x4, scoped, tag = 'scoped memory for forward.1']
    #allocation7 [shape = 'u8[8192]{0}', space=vmem, size = 0x2000, scoped, tag = 'input window, operand 2, single buffered']
    #allocation8 [shape = 'u8[8192]{0}', space=vmem, size = 0x2000, scoped, tag = 'input window, operand 3, single buffered']
    #allocation9 [shape = 's32[1]{0}', space=sflag, size = 0x4, scoped, tag = 'scoped memory for forward.1']
    #allocation10 [shape = 'u8[8192]{0}', space=vmem, size = 0x2000, scoped, tag = 'input window, operand 4, single buffered']
    #allocation11 [shape = 'u8[4096]{0}', space=vmem, size = 0x1000, scoped, tag = 'input window, operand 5, single buffered']
    #allocation12 [shape = 's32[1]{0}', space=sflag, size = 0x4, scoped, tag = 'scoped memory for forward.1']
    #allocation13 [shape = 'u8[1024]{0}', space=vmem, size = 0x400, scoped, tag = 'output window, operand 0, single buffered']
    #allocation14 [shape = 'u8[1024]{0}', space=vmem, size = 0x400, scoped, tag = 'output window, operand 1, single buffered']
    #allocation15 [shape = 's32[1]{0}', space=sflag, size = 0x4, scoped, tag = 'scoped memory for forward.1']
    %19 = vsyncpa [#allocation3], 0
    %20 = vsyncpa [#allocation6], 0
    %21 = vsyncpa [#allocation9], 0
    %22 = vsyncpa [#allocation12], 0
    %23 = vsyncpa [#allocation4], 0
    %24 = vsyncpa [#allocation15], 0
    // Predicated region
    $region2: #{forward.1} parent=1 // pred_check
      _
    $region3: #{forward.1} parent=1 // pred_check_branch
      %26 = sbr.rel (0) target = $region5
    $region4: #{forward.1} parent=1 // pred_region
      %s28 = ssub.s32 32, 32
      %29 = vsyncadd [#allocation3], %s28
      %s31 = sshll.u32 [#allocation2], 4
      %s32 = int_to_ptr.vmem [resolvable:$true] %s31
      %34 = dma.hbm_to_vmem [thread:$0]  %s0, 32, %s32, [#allocation3]
    $region5: #{forward.1} parent=1 // pred_fallthru
      _
    // Predicated region
    $region6: #{forward.1} parent=1 // pred_check
      _
    $region7: #{forward.1} parent=1 // pred_check_branch
      %36 = sbr.rel (0) target = $region9
    $region8: #{forward.1} parent=1 // pred_region
      %s38 = ssub.s32 32, 32
      %39 = vsyncadd [#allocation6], %s38
      %s41 = sshll.u32 [#allocation5], 4
      %s42 = int_to_ptr.vmem [resolvable:$true] %s41
      %44 = dma.hbm_to_vmem [thread:$0]  %s1, 32, %s42, [#allocation6]
    $region9: #{forward.1} parent=1 // pred_fallthru
      _
    // Predicated region
    $region10: #{forward.1} parent=1 // pred_check
      _
    $region11: #{forward.1} parent=1 // pred_check_branch
      %46 = sbr.rel (0) target = $region13
    $region12: #{forward.1} parent=1 // pred_region
      %s48 = ssub.s32 256, 256
      %49 = vsyncadd [#allocation6], %s48
      %s50 = sshll.u32 [#allocation7], 4
      %s51 = int_to_ptr.vmem [resolvable:$true] %s50
      %56 = dma.hbm_to_vmem [thread:$0]  %s2, 256, %s51, [#allocation6], 128, 128, 8
    $region13: #{forward.1} parent=1 // pred_fallthru
      _
    // Predicated region
    $region14: #{forward.1} parent=1 // pred_check
      _
    $region15: #{forward.1} parent=1 // pred_check_branch
      %58 = sbr.rel (0) target = $region17
    $region16: #{forward.1} parent=1 // pred_region
      %s60 = ssub.s32 256, 256
      %61 = vsyncadd [#allocation9], %s60
      %s62 = sshll.u32 [#allocation8], 4
      %s63 = int_to_ptr.vmem [resolvable:$true] %s62
      %68 = dma.hbm_to_vmem [thread:$0]  %s3, 256, %s63, [#allocation9], 128, 128, 8
    $region17: #{forward.1} parent=1 // pred_fallthru
      _
    // Predicated region
    $region18: #{forward.1} parent=1 // pred_check
      _
    $region19: #{forward.1} parent=1 // pred_check_branch
      %70 = sbr.rel (0) target = $region21
    $region20: #{forward.1} parent=1 // pred_region
      %s72 = ssub.s32 256, 256
      %73 = vsyncadd [#allocation9], %s72
      %s74 = sshll.u32 [#allocation10], 4
      %s75 = int_to_ptr.vmem [resolvable:$true] %s74
      %80 = dma.hbm_to_vmem [thread:$0]  %s4, 256, %s75, [#allocation9], 128, 128, 8
    $region21: #{forward.1} parent=1 // pred_fallthru
      _
    // Predicated region
    $region22: #{forward.1} parent=1 // pred_check
      _
    $region23: #{forward.1} parent=1 // pred_check_branch
      %82 = sbr.rel (0) target = $region25
    $region24: #{forward.1} parent=1 // pred_region
      %s84 = ssub.s32 128, 128
      %85 = vsyncadd [#allocation12], %s84
      %s87 = sshll.u32 [#allocation11], 4
      %s88 = int_to_ptr.vmem [resolvable:$true] %s87
      %90 = dma.hbm_to_vmem [thread:$0]  %s5, 128, %s88, [#allocation12]
    $region25: #{forward.1} parent=1 // pred_fallthru
      _
    // Predicated region
    $region26: #{forward.1} parent=1 // pred_check
      _
    $region27: #{forward.1} parent=1 // pred_check_branch
      %92 = sbr.rel (0) target = $region29
    $region28: #{forward.1} parent=1 // pred_region
      _
    $region29: #{forward.1} parent=1 // pred_fallthru
      _
    // Predicated region
    $region30: #{forward.1} parent=1 // pred_check
      _
    $region31: #{forward.1} parent=1 // pred_check_branch
      %94 = sbr.rel (0) target = $region33
    $region32: #{forward.1} parent=1 // pred_region
      _
    $region33: #{forward.1} parent=1 // pred_fallthru
      _
    // Predicated region
    $region34: #{forward.1} parent=1 // pred_check
      _
    $region35: #{forward.1} parent=1 // pred_check_branch
      %96 = sbr.rel (0) target = $region37
    $region36: #{forward.1} parent=1 // pred_region
      _
    $region37: #{forward.1} parent=1 // pred_fallthru
      _
    // Predicated region
    $region38: #{forward.1} parent=1 // pred_check
      _
    $region39: #{forward.1} parent=1 // pred_check_branch
      %98 = sbr.rel (0) target = $region41
    $region40: #{forward.1} parent=1 // pred_region
      _
    $region41: #{forward.1} parent=1 // pred_fallthru
      _
    // Predicated region
    $region42: #{forward.1} parent=1 // pred_check
      _
    $region43: #{forward.1} parent=1 // pred_check_branch
      %100 = sbr.rel (0) target = $region45
    $region44: #{forward.1} parent=1 // pred_region
      _
    $region45: #{forward.1} parent=1 // pred_fallthru
      _
    // Predicated region
    $region46: #{forward.1} parent=1 // pred_check
      _
    $region47: #{forward.1} parent=1 // pred_check_branch
      %102 = sbr.rel (0) target = $region49
    $region48: #{forward.1} parent=1 // pred_region
      _
    $region49: #{forward.1} parent=1 // pred_fallthru
      _
    // Predicated region
    $region50: #{forward.1} parent=1 // pred_check
      _
    $region51: #{forward.1} parent=1 // pred_check_branch
      %104 = sbr.rel (0) target = $region53
    $region52: #{forward.1} parent=1 // pred_region
      %105 = dma.done [#allocation3], 32
    $region53: #{forward.1} parent=1 // pred_fallthru
      _
    // Predicated region
    $region54: #{forward.1} parent=1 // pred_check
      _
    $region55: #{forward.1} parent=1 // pred_check_branch
      %107 = sbr.rel (0) target = $region57
    $region56: #{forward.1} parent=1 // pred_region
      %108 = dma.done [#allocation6], 32
    $region57: #{forward.1} parent=1 // pred_fallthru
      _
    // Predicated region
    $region58: #{forward.1} parent=1 // pred_check
      _
    $region59: #{forward.1} parent=1 // pred_check_branch
      %110 = sbr.rel (0) target = $region61
    $region60: #{forward.1} parent=1 // pred_region
      %111 = dma.done [#allocation6], 256
    $region61: #{forward.1} parent=1 // pred_fallthru
      _
    // Predicated region
    $region62: #{forward.1} parent=1 // pred_check
      _
    $region63: #{forward.1} parent=1 // pred_check_branch
      %113 = sbr.rel (0) target = $region65
    $region64: #{forward.1} parent=1 // pred_region
      %114 = dma.done [#allocation9], 256
    $region65: #{forward.1} parent=1 // pred_fallthru
      _
    // Predicated region
    $region66: #{forward.1} parent=1 // pred_check
      _
    $region67: #{forward.1} parent=1 // pred_check_branch
      %116 = sbr.rel (0) target = $region69
    $region68: #{forward.1} parent=1 // pred_region
      %117 = dma.done [#allocation9], 256
    $region69: #{forward.1} parent=1 // pred_fallthru
      _
    // Predicated region
    $region70: #{forward.1} parent=1 // pred_check
      _
    $region71: #{forward.1} parent=1 // pred_check_branch
      %119 = sbr.rel (0) target = $region73
    $region72: #{forward.1} parent=1 // pred_region
      %120 = dma.done [#allocation12], 128
    $region73: #{forward.1} parent=1 // pred_fallthru
      _
    %v121 = vld [vmem:[#allocation2] sm:$0x3]
    %v122 = vld [vmem:[#allocation5] sm:$0x3]
    %v123 = vld [vmem:[#allocation7] sm:$0xff]
    %v124 = vld [vmem:[#allocation7 + $0x8] sm:$0xff]
    %v125 = vld [vmem:[%s9] sm:$0x1]
    %v126 = vld [vmem:[%s10] sm:$0x1]
    %v127 = vld [vmem:[%s11] sm:$0x1]
    %v129 = vlaneseq
    %v130 = vshrl.u32 %v129, 7
    %v131 = vsub.s32 0, %v130
    %v132 = vrot.slane %v125, %v131
    %vm134 = vcmask 130048
    %v136 = vsel %vm134, %v122, 0
    %138 = vmatprep.subr.mxu0 0.0
    %139 = vmatpush1.msra.mxu0 %v123
    %140 = vmatprep.subr.mxu0 0.0
    %141 = vmatpush1.msra.mxu0 %v124
    %142 = vmatprep.subr.mxu0 0.0
    %143 = vmatpush1.msra.mxu0 0.0
    %144 = vmatprep.subr.mxu0 0.0
    %145 = vmatpush1.msra.mxu0 0.0
    %146 = vmatprep.subr.mxu0 0.0
    %147 = vmatpush1.msra.mxu0 0.0
    %148 = vmatprep.subr.mxu0 0.0
    %149 = vmatpush1.msra.mxu0 0.0
    %150 = vmatprep.subr.mxu0 0.0
    %151 = vmatpush1.msra.mxu0 0.0
    %152 = vmatprep.subr.mxu0 0.0
    %153 = vmatpush1.msra.mxu0 0.0
    %154 = vmatprep.subr.mxu0 0.0
    %155 = vmatpush1.msra.mxu0 0.0
    %156 = vmatprep.subr.mxu0 0.0
    %157 = vmatpush1.msra.mxu0 0.0
    %158 = vmatprep.subr.mxu0 0.0
    %159 = vmatpush1.msra.mxu0 0.0
    %160 = vmatprep.subr.mxu0 0.0
    %161 = vmatpush1.msra.mxu0 0.0
    %162 = vmatprep.subr.mxu0 0.0
    %163 = vmatpush1.msra.mxu0 0.0
    %164 = vmatprep.subr.mxu0 0.0
    %165 = vmatpush1.msra.mxu0 0.0
    %166 = vmatprep.subr.mxu0 0.0
    %167 = vmatpush1.msra.mxu0 0.0
    %168 = vmatprep.subr.mxu0 0.0
    %169 = vmatpush1.msra.mxu0 0.0
    %170 = vmatprep.subr.mxu0 0.0
    %171 = vmatpush1.msra.mxu0 0.0
    %172 = vmatprep.subr.mxu0 0.0
    %173 = vmatpush1.msra.mxu0 0.0
    %174 = vmatprep.subr.mxu0 0.0
    %175 = vmatpush1.msra.mxu0 0.0
    %176 = vmatprep.subr.mxu0 0.0
    %177 = vmatpush1.msra.mxu0 0.0
    %178 = vmatprep.subr.mxu0 0.0
    %179 = vmatpush1.msra.mxu0 0.0
    %180 = vmatprep.subr.mxu0 0.0
    %181 = vmatpush1.msra.mxu0 0.0
    %182 = vmatprep.subr.mxu0 0.0
    %183 = vmatpush1.msra.mxu0 0.0
    %184 = vmatprep.subr.mxu0 0.0
    %185 = vmatpush1.msra.mxu0 0.0
    %186 = vmatprep.subr.mxu0 0.0
    %187 = vmatpush1.msra.mxu0 0.0
    %188 = vmatprep.subr.mxu0 0.0
    %189 = vmatpush1.msra.mxu0 0.0
    %190 = vmatprep.subr.mxu0 0.0
    %191 = vmatpush1.msra.mxu0 0.0
    %192 = vmatprep.subr.mxu0 0.0
    %193 = vmatpush1.msra.mxu0 0.0
    %194 = vmatprep.subr.mxu0 0.0
    %195 = vmatpush1.msra.mxu0 0.0
    %196 = vmatprep.subr.mxu0 0.0
    %197 = vmatpush1.msra.mxu0 0.0
    %198 = vmatprep.subr.mxu0 0.0
    %199 = vmatpush1.msra.mxu0 0.0
    %200 = vmatprep.subr.mxu0 0.0
    %201 = vmatpush1.msra.mxu0 0.0
    %202 = vmatprep.mubr.f32.mxu0 0.0
    %203 = vmatmul.mubr.f32.gmra.mrb[0].mxu0 %v136
    %v204 = vpop.f32.mrb[0].mxu0
    %v205 = vadd.f32 %v132, %v204
    %v206 = vpop.f32.mrb[0].mxu0
    %207 = vdwg.mxu0
    %v209 = vlaneseq
    %v210 = vshrl.u32 %v209, 7
    %v211 = vsub.s32 0, %v210
    %v212 = vrot.slane %v126, %v211
    %v215 = vsel %vm134, %v121, 0
    %217 = vmatprep.subr.mxu0 0.0
    %218 = vmatpush1.msra.mxu0 %v123
    %219 = vmatprep.subr.mxu0 0.0
    %220 = vmatpush1.msra.mxu0 %v124
    %221 = vmatprep.subr.mxu0 0.0
    %222 = vmatpush1.msra.mxu0 0.0
    %223 = vmatprep.subr.mxu0 0.0
    %224 = vmatpush1.msra.mxu0 0.0
    %225 = vmatprep.subr.mxu0 0.0
    %226 = vmatpush1.msra.mxu0 0.0
    %227 = vmatprep.subr.mxu0 0.0
    %228 = vmatpush1.msra.mxu0 0.0
    %229 = vmatprep.subr.mxu0 0.0
    %230 = vmatpush1.msra.mxu0 0.0
    %231 = vmatprep.subr.mxu0 0.0
    %232 = vmatpush1.msra.mxu0 0.0
    %233 = vmatprep.subr.mxu0 0.0
    %234 = vmatpush1.msra.mxu0 0.0
    %235 = vmatprep.subr.mxu0 0.0
    %236 = vmatpush1.msra.mxu0 0.0
    %237 = vmatprep.subr.mxu0 0.0
    %238 = vmatpush1.msra.mxu0 0.0
    %239 = vmatprep.subr.mxu0 0.0
    %240 = vmatpush1.msra.mxu0 0.0
    %241 = vmatprep.subr.mxu0 0.0
    %242 = vmatpush1.msra.mxu0 0.0
    %243 = vmatprep.subr.mxu0 0.0
    %244 = vmatpush1.msra.mxu0 0.0
    %245 = vmatprep.subr.mxu0 0.0
    %246 = vmatpush1.msra.mxu0 0.0
    %247 = vmatprep.subr.mxu0 0.0
    %248 = vmatpush1.msra.mxu0 0.0
    %249 = vmatprep.subr.mxu0 0.0
    %250 = vmatpush1.msra.mxu0 0.0
    %251 = vmatprep.subr.mxu0 0.0
    %252 = vmatpush1.msra.mxu0 0.0
    %253 = vmatprep.subr.mxu0 0.0
    %254 = vmatpush1.msra.mxu0 0.0
    %255 = vmatprep.subr.mxu0 0.0
    %256 = vmatpush1.msra.mxu0 0.0
    %257 = vmatprep.subr.mxu0 0.0
    %258 = vmatpush1.msra.mxu0 0.0
    %259 = vmatprep.subr.mxu0 0.0
    %260 = vmatpush1.msra.mxu0 0.0
    %261 = vmatprep.subr.mxu0 0.0
    %262 = vmatpush1.msra.mxu0 0.0
    %263 = vmatprep.subr.mxu0 0.0
    %264 = vmatpush1.msra.mxu0 0.0
    %265 = vmatprep.subr.mxu0 0.0
    %266 = vmatpush1.msra.mxu0 0.0
    %267 = vmatprep.subr.mxu0 0.0
    %268 = vmatpush1.msra.mxu0 0.0
    %269 = vmatprep.subr.mxu0 0.0
    %270 = vmatpush1.msra.mxu0 0.0
    %271 = vmatprep.subr.mxu0 0.0
    %272 = vmatpush1.msra.mxu0 0.0
    %273 = vmatprep.subr.mxu0 0.0
    %274 = vmatpush1.msra.mxu0 0.0
    %275 = vmatprep.subr.mxu0 0.0
    %276 = vmatpush1.msra.mxu0 0.0
    %277 = vmatprep.subr.mxu0 0.0
    %278 = vmatpush1.msra.mxu0 0.0
    %279 = vmatprep.subr.mxu0 0.0
    %280 = vmatpush1.msra.mxu0 0.0
    %281 = vmatprep.mubr.f32.mxu0 0.0
    %282 = vmatmul.mubr.f32.gmra.mrb[0].mxu0 %v215
    %v283 = vpop.f32.mrb[0].mxu0
    %v284 = vadd.f32 %v212, %v283
    %v285 = vpop.f32.mrb[0].mxu0
    %286 = vdwg.mxu0
    %v287 = vmax.f32 %v284, 0.0
    %v288 = vld [vmem:[#allocation8] sm:$0xff]
    %v289 = vld [vmem:[#allocation8 + $0x8] sm:$0xff]
    %v291 = vsel %vm134, %v287, 0
    %293 = vmatprep.subr.mxu0 0.0
    %294 = vmatpush1.msra.mxu0 %v288
    %295 = vmatprep.subr.mxu0 0.0
    %296 = vmatpush1.msra.mxu0 %v289
    %297 = vmatprep.subr.mxu0 0.0
    %298 = vmatpush1.msra.mxu0 0.0
    %299 = vmatprep.subr.mxu0 0.0
    %300 = vmatpush1.msra.mxu0 0.0
    %301 = vmatprep.subr.mxu0 0.0
    %302 = vmatpush1.msra.mxu0 0.0
    %303 = vmatprep.subr.mxu0 0.0
    %304 = vmatpush1.msra.mxu0 0.0
    %305 = vmatprep.subr.mxu0 0.0
    %306 = vmatpush1.msra.mxu0 0.0
    %307 = vmatprep.subr.mxu0 0.0
    %308 = vmatpush1.msra.mxu0 0.0
    %309 = vmatprep.subr.mxu0 0.0
    %310 = vmatpush1.msra.mxu0 0.0
    %311 = vmatprep.subr.mxu0 0.0
    %312 = vmatpush1.msra.mxu0 0.0
    %313 = vmatprep.subr.mxu0 0.0
    %314 = vmatpush1.msra.mxu0 0.0
    %315 = vmatprep.subr.mxu0 0.0
    %316 = vmatpush1.msra.mxu0 0.0
    %317 = vmatprep.subr.mxu0 0.0
    %318 = vmatpush1.msra.mxu0 0.0
    %319 = vmatprep.subr.mxu0 0.0
    %320 = vmatpush1.msra.mxu0 0.0
    %321 = vmatprep.subr.mxu0 0.0
    %322 = vmatpush1.msra.mxu0 0.0
    %323 = vmatprep.subr.mxu0 0.0
    %324 = vmatpush1.msra.mxu0 0.0
    %325 = vmatprep.subr.mxu0 0.0
    %326 = vmatpush1.msra.mxu0 0.0
    %327 = vmatprep.subr.mxu0 0.0
    %328 = vmatpush1.msra.mxu0 0.0
    %329 = vmatprep.subr.mxu0 0.0
    %330 = vmatpush1.msra.mxu0 0.0
    %331 = vmatprep.subr.mxu0 0.0
    %332 = vmatpush1.msra.mxu0 0.0
    %333 = vmatprep.subr.mxu0 0.0
    %334 = vmatpush1.msra.mxu0 0.0
    %335 = vmatprep.subr.mxu0 0.0
    %336 = vmatpush1.msra.mxu0 0.0
    %337 = vmatprep.subr.mxu0 0.0
    %338 = vmatpush1.msra.mxu0 0.0
    %339 = vmatprep.subr.mxu0 0.0
    %340 = vmatpush1.msra.mxu0 0.0
    %341 = vmatprep.subr.mxu0 0.0
    %342 = vmatpush1.msra.mxu0 0.0
    %343 = vmatprep.subr.mxu0 0.0
    %344 = vmatpush1.msra.mxu0 0.0
    %345 = vmatprep.subr.mxu0 0.0
    %346 = vmatpush1.msra.mxu0 0.0
    %347 = vmatprep.subr.mxu0 0.0
    %348 = vmatpush1.msra.mxu0 0.0
    %349 = vmatprep.subr.mxu0 0.0
    %350 = vmatpush1.msra.mxu0 0.0
    %351 = vmatprep.subr.mxu0 0.0
    %352 = vmatpush1.msra.mxu0 0.0
    %353 = vmatprep.subr.mxu0 0.0
    %354 = vmatpush1.msra.mxu0 0.0
    %355 = vmatprep.subr.mxu0 0.0
    %356 = vmatpush1.msra.mxu0 0.0
    %357 = vmatprep.mubr.f32.mxu0 0.0
    %358 = vmatmul.mubr.f32.gmra.mrb[0].mxu0 %v291
    %v359 = vpop.f32.mrb[0].mxu0
    %v360 = vadd.f32 0.0, %v359
    %v361 = vpop.f32.mrb[0].mxu0
    %362 = vdwg.mxu0
    %v364 = vsel %vm134, %v205, 0
    %366 = vmatprep.subr.mxu0 0.0
    %367 = vmatpush1.msra.mxu0 %v288
    %368 = vmatprep.subr.mxu0 0.0
    %369 = vmatpush1.msra.mxu0 %v289
    %370 = vmatprep.subr.mxu0 0.0
    %371 = vmatpush1.msra.mxu0 0.0
    %372 = vmatprep.subr.mxu0 0.0
    %373 = vmatpush1.msra.mxu0 0.0
    %374 = vmatprep.subr.mxu0 0.0
    %375 = vmatpush1.msra.mxu0 0.0
    %376 = vmatprep.subr.mxu0 0.0
    %377 = vmatpush1.msra.mxu0 0.0
    %378 = vmatprep.subr.mxu0 0.0
    %379 = vmatpush1.msra.mxu0 0.0
    %380 = vmatprep.subr.mxu0 0.0
    %381 = vmatpush1.msra.mxu0 0.0
    %382 = vmatprep.subr.mxu0 0.0
    %383 = vmatpush1.msra.mxu0 0.0
    %384 = vmatprep.subr.mxu0 0.0
    %385 = vmatpush1.msra.mxu0 0.0
    %386 = vmatprep.subr.mxu0 0.0
    %387 = vmatpush1.msra.mxu0 0.0
    %388 = vmatprep.subr.mxu0 0.0
    %389 = vmatpush1.msra.mxu0 0.0
    %390 = vmatprep.subr.mxu0 0.0
    %391 = vmatpush1.msra.mxu0 0.0
    %392 = vmatprep.subr.mxu0 0.0
    %393 = vmatpush1.msra.mxu0 0.0
    %394 = vmatprep.subr.mxu0 0.0
    %395 = vmatpush1.msra.mxu0 0.0
    %396 = vmatprep.subr.mxu0 0.0
    %397 = vmatpush1.msra.mxu0 0.0
    %398 = vmatprep.subr.mxu0 0.0
    %399 = vmatpush1.msra.mxu0 0.0
    %400 = vmatprep.subr.mxu0 0.0
    %401 = vmatpush1.msra.mxu0 0.0
    %402 = vmatprep.subr.mxu0 0.0
    %403 = vmatpush1.msra.mxu0 0.0
    %404 = vmatprep.subr.mxu0 0.0
    %405 = vmatpush1.msra.mxu0 0.0
    %406 = vmatprep.subr.mxu0 0.0
    %407 = vmatpush1.msra.mxu0 0.0
    %408 = vmatprep.subr.mxu0 0.0
    %409 = vmatpush1.msra.mxu0 0.0
    %410 = vmatprep.subr.mxu0 0.0
    %411 = vmatpush1.msra.mxu0 0.0
    %412 = vmatprep.subr.mxu0 0.0
    %413 = vmatpush1.msra.mxu0 0.0
    %414 = vmatprep.subr.mxu0 0.0
    %415 = vmatpush1.msra.mxu0 0.0
    %416 = vmatprep.subr.mxu0 0.0
    %417 = vmatpush1.msra.mxu0 0.0
    %418 = vmatprep.subr.mxu0 0.0
    %419 = vmatpush1.msra.mxu0 0.0
    %420 = vmatprep.subr.mxu0 0.0
    %421 = vmatpush1.msra.mxu0 0.0
    %422 = vmatprep.subr.mxu0 0.0
    %423 = vmatpush1.msra.mxu0 0.0
    %424 = vmatprep.subr.mxu0 0.0
    %425 = vmatpush1.msra.mxu0 0.0
    %426 = vmatprep.subr.mxu0 0.0
    %427 = vmatpush1.msra.mxu0 0.0
    %428 = vmatprep.subr.mxu0 0.0
    %429 = vmatpush1.msra.mxu0 0.0
    %430 = vmatprep.mubr.f32.mxu0 0.0
    %431 = vmatmul.mubr.f32.gmra.mrb[0].mxu0 %v364
    %v432 = vpop.f32.mrb[0].mxu0
    %v433 = vadd.f32 0.0, %v432
    %v434 = vpop.f32.mrb[0].mxu0
    %435 = vdwg.mxu0
    %vm436 = vcmp.gt.f32.partialorder %v360, 0.0
    %v437 = vsel %vm436, %v360, 0.0
    %v438 = vsel %vm436, %v433, 0.0
    %v439 = vld [vmem:[#allocation10] sm:$0xff]
    %v440 = vld [vmem:[#allocation10 + $0x8] sm:$0xff]
    %v442 = vsel %vm134, %v437, 0
    %444 = vmatprep.subr.mxu0 0.0
    %445 = vmatpush1.msra.mxu0 %v439
    %446 = vmatprep.subr.mxu0 0.0
    %447 = vmatpush1.msra.mxu0 %v440
    %448 = vmatprep.subr.mxu0 0.0
    %449 = vmatpush1.msra.mxu0 0.0
    %450 = vmatprep.subr.mxu0 0.0
    %451 = vmatpush1.msra.mxu0 0.0
    %452 = vmatprep.subr.mxu0 0.0
    %453 = vmatpush1.msra.mxu0 0.0
    %454 = vmatprep.subr.mxu0 0.0
    %455 = vmatpush1.msra.mxu0 0.0
    %456 = vmatprep.subr.mxu0 0.0
    %457 = vmatpush1.msra.mxu0 0.0
    %458 = vmatprep.subr.mxu0 0.0
    %459 = vmatpush1.msra.mxu0 0.0
    %460 = vmatprep.subr.mxu0 0.0
    %461 = vmatpush1.msra.mxu0 0.0
    %462 = vmatprep.subr.mxu0 0.0
    %463 = vmatpush1.msra.mxu0 0.0
    %464 = vmatprep.subr.mxu0 0.0
    %465 = vmatpush1.msra.mxu0 0.0
    %466 = vmatprep.subr.mxu0 0.0
    %467 = vmatpush1.msra.mxu0 0.0
    %468 = vmatprep.subr.mxu0 0.0
    %469 = vmatpush1.msra.mxu0 0.0
    %470 = vmatprep.subr.mxu0 0.0
    %471 = vmatpush1.msra.mxu0 0.0
    %472 = vmatprep.subr.mxu0 0.0
    %473 = vmatpush1.msra.mxu0 0.0
    %474 = vmatprep.subr.mxu0 0.0
    %475 = vmatpush1.msra.mxu0 0.0
    %476 = vmatprep.subr.mxu0 0.0
    %477 = vmatpush1.msra.mxu0 0.0
    %478 = vmatprep.subr.mxu0 0.0
    %479 = vmatpush1.msra.mxu0 0.0
    %480 = vmatprep.subr.mxu0 0.0
    %481 = vmatpush1.msra.mxu0 0.0
    %482 = vmatprep.subr.mxu0 0.0
    %483 = vmatpush1.msra.mxu0 0.0
    %484 = vmatprep.subr.mxu0 0.0
    %485 = vmatpush1.msra.mxu0 0.0
    %486 = vmatprep.subr.mxu0 0.0
    %487 = vmatpush1.msra.mxu0 0.0
    %488 = vmatprep.subr.mxu0 0.0
    %489 = vmatpush1.msra.mxu0 0.0
    %490 = vmatprep.subr.mxu0 0.0
    %491 = vmatpush1.msra.mxu0 0.0
    %492 = vmatprep.subr.mxu0 0.0
    %493 = vmatpush1.msra.mxu0 0.0
    %494 = vmatprep.subr.mxu0 0.0
    %495 = vmatpush1.msra.mxu0 0.0
    %496 = vmatprep.subr.mxu0 0.0
    %497 = vmatpush1.msra.mxu0 0.0
    %498 = vmatprep.subr.mxu0 0.0
    %499 = vmatpush1.msra.mxu0 0.0
    %500 = vmatprep.subr.mxu0 0.0
    %501 = vmatpush1.msra.mxu0 0.0
    %502 = vmatprep.subr.mxu0 0.0
    %503 = vmatpush1.msra.mxu0 0.0
    %504 = vmatprep.subr.mxu0 0.0
    %505 = vmatpush1.msra.mxu0 0.0
    %506 = vmatprep.subr.mxu0 0.0
    %507 = vmatpush1.msra.mxu0 0.0
    %508 = vmatprep.mubr.f32.mxu0 0.0
    %509 = vmatmul.mubr.f32.gmra.mrb[0].mxu0 %v442
    %v510 = vpop.f32.mrb[0].mxu0
    %v511 = vadd.f32 0.0, %v510
    %v512 = vpop.f32.mrb[0].mxu0
    %513 = vdwg.mxu0
    %v515 = vsel %vm134, %v438, 0
    %517 = vmatprep.subr.mxu0 0.0
    %518 = vmatpush1.msra.mxu0 %v439
    %519 = vmatprep.subr.mxu0 0.0
    %520 = vmatpush1.msra.mxu0 %v440
    %521 = vmatprep.subr.mxu0 0.0
    %522 = vmatpush1.msra.mxu0 0.0
    %523 = vmatprep.subr.mxu0 0.0
    %524 = vmatpush1.msra.mxu0 0.0
    %525 = vmatprep.subr.mxu0 0.0
    %526 = vmatpush1.msra.mxu0 0.0
    %527 = vmatprep.subr.mxu0 0.0
    %528 = vmatpush1.msra.mxu0 0.0
    %529 = vmatprep.subr.mxu0 0.0
    %530 = vmatpush1.msra.mxu0 0.0
    %531 = vmatprep.subr.mxu0 0.0
    %532 = vmatpush1.msra.mxu0 0.0
    %533 = vmatprep.subr.mxu0 0.0
    %534 = vmatpush1.msra.mxu0 0.0
    %535 = vmatprep.subr.mxu0 0.0
    %536 = vmatpush1.msra.mxu0 0.0
    %537 = vmatprep.subr.mxu0 0.0
    %538 = vmatpush1.msra.mxu0 0.0
    %539 = vmatprep.subr.mxu0 0.0
    %540 = vmatpush1.msra.mxu0 0.0
    %541 = vmatprep.subr.mxu0 0.0
    %542 = vmatpush1.msra.mxu0 0.0
    %543 = vmatprep.subr.mxu0 0.0
    %544 = vmatpush1.msra.mxu0 0.0
    %545 = vmatprep.subr.mxu0 0.0
    %546 = vmatpush1.msra.mxu0 0.0
    %547 = vmatprep.subr.mxu0 0.0
    %548 = vmatpush1.msra.mxu0 0.0
    %549 = vmatprep.subr.mxu0 0.0
    %550 = vmatpush1.msra.mxu0 0.0
    %551 = vmatprep.subr.mxu0 0.0
    %552 = vmatpush1.msra.mxu0 0.0
    %553 = vmatprep.subr.mxu0 0.0
    %554 = vmatpush1.msra.mxu0 0.0
    %555 = vmatprep.subr.mxu0 0.0
    %556 = vmatpush1.msra.mxu0 0.0
    %557 = vmatprep.subr.mxu0 0.0
    %558 = vmatpush1.msra.mxu0 0.0
    %559 = vmatprep.subr.mxu0 0.0
    %560 = vmatpush1.msra.mxu0 0.0
    %561 = vmatprep.subr.mxu0 0.0
    %562 = vmatpush1.msra.mxu0 0.0
    %563 = vmatprep.subr.mxu0 0.0
    %564 = vmatpush1.msra.mxu0 0.0
    %565 = vmatprep.subr.mxu0 0.0
    %566 = vmatpush1.msra.mxu0 0.0
    %567 = vmatprep.subr.mxu0 0.0
    %568 = vmatpush1.msra.mxu0 0.0
    %569 = vmatprep.subr.mxu0 0.0
    %570 = vmatpush1.msra.mxu0 0.0
    %571 = vmatprep.subr.mxu0 0.0
    %572 = vmatpush1.msra.mxu0 0.0
    %573 = vmatprep.subr.mxu0 0.0
    %574 = vmatpush1.msra.mxu0 0.0
    %575 = vmatprep.subr.mxu0 0.0
    %576 = vmatpush1.msra.mxu0 0.0
    %577 = vmatprep.subr.mxu0 0.0
    %578 = vmatpush1.msra.mxu0 0.0
    %579 = vmatprep.subr.mxu0 0.0
    %580 = vmatpush1.msra.mxu0 0.0
    %581 = vmatprep.mubr.f32.mxu0 0.0
    %582 = vmatmul.mubr.f32.gmra.mrb[0].mxu0 %v515
    %v583 = vpop.f32.mrb[0].mxu0
    %v584 = vadd.f32 0.0, %v583
    %v585 = vpop.f32.mrb[0].mxu0
    %586 = vdwg.mxu0
    %v587 = vld [vmem:[#allocation11] sm:$0xff]
    %vm588 = vcmask 64512
    %v590 = vsel %vm588, %v511, 0
    %592 = vmatprep.subr.mxu0 0.0
    %593 = vmatpush1.msra.mxu0 %v587
    %594 = vmatprep.subr.mxu0 0.0
    %595 = vmatpush1.msra.mxu0 0.0
    %596 = vmatprep.subr.mxu0 0.0
    %597 = vmatpush1.msra.mxu0 0.0
    %598 = vmatprep.subr.mxu0 0.0
    %599 = vmatpush1.msra.mxu0 0.0
    %600 = vmatprep.subr.mxu0 0.0
    %601 = vmatpush1.msra.mxu0 0.0
    %602 = vmatprep.subr.mxu0 0.0
    %603 = vmatpush1.msra.mxu0 0.0
    %604 = vmatprep.subr.mxu0 0.0
    %605 = vmatpush1.msra.mxu0 0.0
    %606 = vmatprep.subr.mxu0 0.0
    %607 = vmatpush1.msra.mxu0 0.0
    %608 = vmatprep.subr.mxu0 0.0
    %609 = vmatpush1.msra.mxu0 0.0
    %610 = vmatprep.subr.mxu0 0.0
    %611 = vmatpush1.msra.mxu0 0.0
    %612 = vmatprep.subr.mxu0 0.0
    %613 = vmatpush1.msra.mxu0 0.0
    %614 = vmatprep.subr.mxu0 0.0
    %615 = vmatpush1.msra.mxu0 0.0
    %616 = vmatprep.subr.mxu0 0.0
    %617 = vmatpush1.msra.mxu0 0.0
    %618 = vmatprep.subr.mxu0 0.0
    %619 = vmatpush1.msra.mxu0 0.0
    %620 = vmatprep.subr.mxu0 0.0
    %621 = vmatpush1.msra.mxu0 0.0
    %622 = vmatprep.subr.mxu0 0.0
    %623 = vmatpush1.msra.mxu0 0.0
    %624 = vmatprep.subr.mxu0 0.0
    %625 = vmatpush1.msra.mxu0 0.0
    %626 = vmatprep.subr.mxu0 0.0
    %627 = vmatpush1.msra.mxu0 0.0
    %628 = vmatprep.subr.mxu0 0.0
    %629 = vmatpush1.msra.mxu0 0.0
    %630 = vmatprep.subr.mxu0 0.0
    %631 = vmatpush1.msra.mxu0 0.0
    %632 = vmatprep.subr.mxu0 0.0
    %633 = vmatpush1.msra.mxu0 0.0
    %634 = vmatprep.subr.mxu0 0.0
    %635 = vmatpush1.msra.mxu0 0.0
    %636 = vmatprep.subr.mxu0 0.0
    %637 = vmatpush1.msra.mxu0 0.0
    %638 = vmatprep.subr.mxu0 0.0
    %639 = vmatpush1.msra.mxu0 0.0
    %640 = vmatprep.subr.mxu0 0.0
    %641 = vmatpush1.msra.mxu0 0.0
    %642 = vmatprep.subr.mxu0 0.0
    %643 = vmatpush1.msra.mxu0 0.0
    %644 = vmatprep.subr.mxu0 0.0
    %645 = vmatpush1.msra.mxu0 0.0
    %646 = vmatprep.subr.mxu0 0.0
    %647 = vmatpush1.msra.mxu0 0.0
    %648 = vmatprep.subr.mxu0 0.0
    %649 = vmatpush1.msra.mxu0 0.0
    %650 = vmatprep.subr.mxu0 0.0
    %651 = vmatpush1.msra.mxu0 0.0
    %652 = vmatprep.subr.mxu0 0.0
    %653 = vmatpush1.msra.mxu0 0.0
    %654 = vmatprep.subr.mxu0 0.0
    %655 = vmatpush1.msra.mxu0 0.0
    %656 = vmatprep.mubr.f32.mxu0 0.0
    %657 = vmatmul.mubr.f32.gmra.mrb[0].mxu0 %v590
    %v658 = vpop.f32.mrb[0].mxu0
    %v659 = vadd.f32 0.0, %v658
    %v660 = vpop.f32.mrb[0].mxu0
    %661 = vdwg.mxu0
    %v663 = vsel %vm588, %v584, 0
    %665 = vmatprep.subr.mxu0 0.0
    %666 = vmatpush1.msra.mxu0 %v587
    %667 = vmatprep.subr.mxu0 0.0
    %668 = vmatpush1.msra.mxu0 0.0
    %669 = vmatprep.subr.mxu0 0.0
    %670 = vmatpush1.msra.mxu0 0.0
    %671 = vmatprep.subr.mxu0 0.0
    %672 = vmatpush1.msra.mxu0 0.0
    %673 = vmatprep.subr.mxu0 0.0
    %674 = vmatpush1.msra.mxu0 0.0
    %675 = vmatprep.subr.mxu0 0.0
    %676 = vmatpush1.msra.mxu0 0.0
    %677 = vmatprep.subr.mxu0 0.0
    %678 = vmatpush1.msra.mxu0 0.0
    %679 = vmatprep.subr.mxu0 0.0
    %680 = vmatpush1.msra.mxu0 0.0
    %681 = vmatprep.subr.mxu0 0.0
    %682 = vmatpush1.msra.mxu0 0.0
    %683 = vmatprep.subr.mxu0 0.0
    %684 = vmatpush1.msra.mxu0 0.0
    %685 = vmatprep.subr.mxu0 0.0
    %686 = vmatpush1.msra.mxu0 0.0
    %687 = vmatprep.subr.mxu0 0.0
    %688 = vmatpush1.msra.mxu0 0.0
    %689 = vmatprep.subr.mxu0 0.0
    %690 = vmatpush1.msra.mxu0 0.0
    %691 = vmatprep.subr.mxu0 0.0
    %692 = vmatpush1.msra.mxu0 0.0
    %693 = vmatprep.subr.mxu0 0.0
    %694 = vmatpush1.msra.mxu0 0.0
    %695 = vmatprep.subr.mxu0 0.0
    %696 = vmatpush1.msra.mxu0 0.0
    %697 = vmatprep.subr.mxu0 0.0
    %698 = vmatpush1.msra.mxu0 0.0
    %699 = vmatprep.subr.mxu0 0.0
    %700 = vmatpush1.msra.mxu0 0.0
    %701 = vmatprep.subr.mxu0 0.0
    %702 = vmatpush1.msra.mxu0 0.0
    %703 = vmatprep.subr.mxu0 0.0
    %704 = vmatpush1.msra.mxu0 0.0
    %705 = vmatprep.subr.mxu0 0.0
    %706 = vmatpush1.msra.mxu0 0.0
    %707 = vmatprep.subr.mxu0 0.0
    %708 = vmatpush1.msra.mxu0 0.0
    %709 = vmatprep.subr.mxu0 0.0
    %710 = vmatpush1.msra.mxu0 0.0
    %711 = vmatprep.subr.mxu0 0.0
    %712 = vmatpush1.msra.mxu0 0.0
    %713 = vmatprep.subr.mxu0 0.0
    %714 = vmatpush1.msra.mxu0 0.0
    %715 = vmatprep.subr.mxu0 0.0
    %716 = vmatpush1.msra.mxu0 0.0
    %717 = vmatprep.subr.mxu0 0.0
    %718 = vmatpush1.msra.mxu0 0.0
    %719 = vmatprep.subr.mxu0 0.0
    %720 = vmatpush1.msra.mxu0 0.0
    %721 = vmatprep.subr.mxu0 0.0
    %722 = vmatpush1.msra.mxu0 0.0
    %723 = vmatprep.subr.mxu0 0.0
    %724 = vmatpush1.msra.mxu0 0.0
    %725 = vmatprep.subr.mxu0 0.0
    %726 = vmatpush1.msra.mxu0 0.0
    %727 = vmatprep.subr.mxu0 0.0
    %728 = vmatpush1.msra.mxu0 0.0
    %729 = vmatprep.mubr.f32.mxu0 0.0
    %730 = vmatmul.mubr.f32.gmra.mrb[0].mxu0 %v663
    %v731 = vpop.f32.mrb[0].mxu0
    %v732 = vadd.f32 0.0, %v731
    %v733 = vpop.f32.mrb[0].mxu0
    %734 = vdwg.mxu0
    %vm735 = vcmp.gt.f32.partialorder %v659, 0.0
    %v736 = vsel %vm735, %v659, 0.0
    %v737 = vsel %vm735, %v732, 0.0
    %v738 = vld [vmem:[%s6] sm:$0xff]
    %v740 = vsel %vm588, %v736, 0
    %742 = vmatprep.subr.mxu0 0.0
    %743 = vmatpush1.msra.mxu0 %v738
    %744 = vmatprep.subr.mxu0 0.0
    %745 = vmatpush1.msra.mxu0 0.0
    %746 = vmatprep.subr.mxu0 0.0
    %747 = vmatpush1.msra.mxu0 0.0
    %748 = vmatprep.subr.mxu0 0.0
    %749 = vmatpush1.msra.mxu0 0.0
    %750 = vmatprep.subr.mxu0 0.0
    %751 = vmatpush1.msra.mxu0 0.0
    %752 = vmatprep.subr.mxu0 0.0
    %753 = vmatpush1.msra.mxu0 0.0
    %754 = vmatprep.subr.mxu0 0.0
    %755 = vmatpush1.msra.mxu0 0.0
    %756 = vmatprep.subr.mxu0 0.0
    %757 = vmatpush1.msra.mxu0 0.0
    %758 = vmatprep.subr.mxu0 0.0
    %759 = vmatpush1.msra.mxu0 0.0
    %760 = vmatprep.subr.mxu0 0.0
    %761 = vmatpush1.msra.mxu0 0.0
    %762 = vmatprep.subr.mxu0 0.0
    %763 = vmatpush1.msra.mxu0 0.0
    %764 = vmatprep.subr.mxu0 0.0
    %765 = vmatpush1.msra.mxu0 0.0
    %766 = vmatprep.subr.mxu0 0.0
    %767 = vmatpush1.msra.mxu0 0.0
    %768 = vmatprep.subr.mxu0 0.0
    %769 = vmatpush1.msra.mxu0 0.0
    %770 = vmatprep.subr.mxu0 0.0
    %771 = vmatpush1.msra.mxu0 0.0
    %772 = vmatprep.subr.mxu0 0.0
    %773 = vmatpush1.msra.mxu0 0.0
    %774 = vmatprep.subr.mxu0 0.0
    %775 = vmatpush1.msra.mxu0 0.0
    %776 = vmatprep.subr.mxu0 0.0
    %777 = vmatpush1.msra.mxu0 0.0
    %778 = vmatprep.subr.mxu0 0.0
    %779 = vmatpush1.msra.mxu0 0.0
    %780 = vmatprep.subr.mxu0 0.0
    %781 = vmatpush1.msra.mxu0 0.0
    %782 = vmatprep.subr.mxu0 0.0
    %783 = vmatpush1.msra.mxu0 0.0
    %784 = vmatprep.subr.mxu0 0.0
    %785 = vmatpush1.msra.mxu0 0.0
    %786 = vmatprep.subr.mxu0 0.0
    %787 = vmatpush1.msra.mxu0 0.0
    %788 = vmatprep.subr.mxu0 0.0
    %789 = vmatpush1.msra.mxu0 0.0
    %790 = vmatprep.subr.mxu0 0.0
    %791 = vmatpush1.msra.mxu0 0.0
    %792 = vmatprep.subr.mxu0 0.0
    %793 = vmatpush1.msra.mxu0 0.0
    %794 = vmatprep.subr.mxu0 0.0
    %795 = vmatpush1.msra.mxu0 0.0
    %796 = vmatprep.subr.mxu0 0.0
    %797 = vmatpush1.msra.mxu0 0.0
    %798 = vmatprep.subr.mxu0 0.0
    %799 = vmatpush1.msra.mxu0 0.0
    %800 = vmatprep.subr.mxu0 0.0
    %801 = vmatpush1.msra.mxu0 0.0
    %802 = vmatprep.subr.mxu0 0.0
    %803 = vmatpush1.msra.mxu0 0.0
    %804 = vmatprep.subr.mxu0 0.0
    %805 = vmatpush1.msra.mxu0 0.0
    %806 = vmatprep.mubr.f32.mxu0 0.0
    %807 = vmatmul.mubr.f32.gmra.mrb[0].mxu0 %v740
    %v808 = vpop.f32.mrb[0].mxu0
    %v809 = vadd.f32 0.0, %v808
    %v810 = vpop.f32.mrb[0].mxu0
    %811 = vdwg.mxu0
    %v813 = vsel %vm588, %v737, 0
    %815 = vmatprep.subr.mxu0 0.0
    %816 = vmatpush1.msra.mxu0 %v738
    %817 = vmatprep.subr.mxu0 0.0
    %818 = vmatpush1.msra.mxu0 0.0
    %819 = vmatprep.subr.mxu0 0.0
    %820 = vmatpush1.msra.mxu0 0.0
    %821 = vmatprep.subr.mxu0 0.0
    %822 = vmatpush1.msra.mxu0 0.0
    %823 = vmatprep.subr.mxu0 0.0
    %824 = vmatpush1.msra.mxu0 0.0
    %825 = vmatprep.subr.mxu0 0.0
    %826 = vmatpush1.msra.mxu0 0.0
    %827 = vmatprep.subr.mxu0 0.0
    %828 = vmatpush1.msra.mxu0 0.0
    %829 = vmatprep.subr.mxu0 0.0
    %830 = vmatpush1.msra.mxu0 0.0
    %831 = vmatprep.subr.mxu0 0.0
    %832 = vmatpush1.msra.mxu0 0.0
    %833 = vmatprep.subr.mxu0 0.0
    %834 = vmatpush1.msra.mxu0 0.0
    %835 = vmatprep.subr.mxu0 0.0
    %836 = vmatpush1.msra.mxu0 0.0
    %837 = vmatprep.subr.mxu0 0.0
    %838 = vmatpush1.msra.mxu0 0.0
    %839 = vmatprep.subr.mxu0 0.0
    %840 = vmatpush1.msra.mxu0 0.0
    %841 = vmatprep.subr.mxu0 0.0
    %842 = vmatpush1.msra.mxu0 0.0
    %843 = vmatprep.subr.mxu0 0.0
    %844 = vmatpush1.msra.mxu0 0.0
    %845 = vmatprep.subr.mxu0 0.0
    %846 = vmatpush1.msra.mxu0 0.0
    %847 = vmatprep.subr.mxu0 0.0
    %848 = vmatpush1.msra.mxu0 0.0
    %849 = vmatprep.subr.mxu0 0.0
    %850 = vmatpush1.msra.mxu0 0.0
    %851 = vmatprep.subr.mxu0 0.0
    %852 = vmatpush1.msra.mxu0 0.0
    %853 = vmatprep.subr.mxu0 0.0
    %854 = vmatpush1.msra.mxu0 0.0
    %855 = vmatprep.subr.mxu0 0.0
    %856 = vmatpush1.msra.mxu0 0.0
    %857 = vmatprep.subr.mxu0 0.0
    %858 = vmatpush1.msra.mxu0 0.0
    %859 = vmatprep.subr.mxu0 0.0
    %860 = vmatpush1.msra.mxu0 0.0
    %861 = vmatprep.subr.mxu0 0.0
    %862 = vmatpush1.msra.mxu0 0.0
    %863 = vmatprep.subr.mxu0 0.0
    %864 = vmatpush1.msra.mxu0 0.0
    %865 = vmatprep.subr.mxu0 0.0
    %866 = vmatpush1.msra.mxu0 0.0
    %867 = vmatprep.subr.mxu0 0.0
    %868 = vmatpush1.msra.mxu0 0.0
    %869 = vmatprep.subr.mxu0 0.0
    %870 = vmatpush1.msra.mxu0 0.0
    %871 = vmatprep.subr.mxu0 0.0
    %872 = vmatpush1.msra.mxu0 0.0
    %873 = vmatprep.subr.mxu0 0.0
    %874 = vmatpush1.msra.mxu0 0.0
    %875 = vmatprep.subr.mxu0 0.0
    %876 = vmatpush1.msra.mxu0 0.0
    %877 = vmatprep.subr.mxu0 0.0
    %878 = vmatpush1.msra.mxu0 0.0
    %879 = vmatprep.mubr.f32.mxu0 0.0
    %880 = vmatmul.mubr.f32.gmra.mrb[0].mxu0 %v813
    %v881 = vpop.f32.mrb[0].mxu0
    %v882 = vadd.f32 0.0, %v881
    %v883 = vpop.f32.mrb[0].mxu0
    %884 = vdwg.mxu0
    %v885 = vsub.f32 0.0, %v809
    %v886 = vmax.f32 %v882, 0.0
    %v887 = vmax.f32 %v885, 0.0
    %v888 = vld [vmem:[%s7] sm:$0xf]
    %vm889 = vcmask 31744
    %v891 = vsel %vm889, %v886, 0
    %vm893 = vcmask 1043456
    %v895 = vsel %vm893, %v888, 0
    %897 = vmatprep.subr.mxu0 0.0
    %898 = vmatpush1.msra.mxu0 %v895
    %899 = vmatprep.subr.mxu0 0.0
    %900 = vmatpush1.msra.mxu0 0.0
    %901 = vmatprep.subr.mxu0 0.0
    %902 = vmatpush1.msra.mxu0 0.0
    %903 = vmatprep.subr.mxu0 0.0
    %904 = vmatpush1.msra.mxu0 0.0
    %905 = vmatprep.subr.mxu0 0.0
    %906 = vmatpush1.msra.mxu0 0.0
    %907 = vmatprep.subr.mxu0 0.0
    %908 = vmatpush1.msra.mxu0 0.0
    %909 = vmatprep.subr.mxu0 0.0
    %910 = vmatpush1.msra.mxu0 0.0
    %911 = vmatprep.subr.mxu0 0.0
    %912 = vmatpush1.msra.mxu0 0.0
    %913 = vmatprep.subr.mxu0 0.0
    %914 = vmatpush1.msra.mxu0 0.0
    %915 = vmatprep.subr.mxu0 0.0
    %916 = vmatpush1.msra.mxu0 0.0
    %917 = vmatprep.subr.mxu0 0.0
    %918 = vmatpush1.msra.mxu0 0.0
    %919 = vmatprep.subr.mxu0 0.0
    %920 = vmatpush1.msra.mxu0 0.0
    %921 = vmatprep.subr.mxu0 0.0
    %922 = vmatpush1.msra.mxu0 0.0
    %923 = vmatprep.subr.mxu0 0.0
    %924 = vmatpush1.msra.mxu0 0.0
    %925 = vmatprep.subr.mxu0 0.0
    %926 = vmatpush1.msra.mxu0 0.0
    %927 = vmatprep.subr.mxu0 0.0
    %928 = vmatpush1.msra.mxu0 0.0
    %929 = vmatprep.subr.mxu0 0.0
    %930 = vmatpush1.msra.mxu0 0.0
    %931 = vmatprep.subr.mxu0 0.0
    %932 = vmatpush1.msra.mxu0 0.0
    %933 = vmatprep.subr.mxu0 0.0
    %934 = vmatpush1.msra.mxu0 0.0
    %935 = vmatprep.subr.mxu0 0.0
    %936 = vmatpush1.msra.mxu0 0.0
    %937 = vmatprep.subr.mxu0 0.0
    %938 = vmatpush1.msra.mxu0 0.0
    %939 = vmatprep.subr.mxu0 0.0
    %940 = vmatpush1.msra.mxu0 0.0
    %941 = vmatprep.subr.mxu0 0.0
    %942 = vmatpush1.msra.mxu0 0.0
    %943 = vmatprep.subr.mxu0 0.0
    %944 = vmatpush1.msra.mxu0 0.0
    %945 = vmatprep.subr.mxu0 0.0
    %946 = vmatpush1.msra.mxu0 0.0
    %947 = vmatprep.subr.mxu0 0.0
    %948 = vmatpush1.msra.mxu0 0.0
    %949 = vmatprep.subr.mxu0 0.0
    %950 = vmatpush1.msra.mxu0 0.0
    %951 = vmatprep.subr.mxu0 0.0
    %952 = vmatpush1.msra.mxu0 0.0
    %953 = vmatprep.subr.mxu0 0.0
    %954 = vmatpush1.msra.mxu0 0.0
    %955 = vmatprep.subr.mxu0 0.0
    %956 = vmatpush1.msra.mxu0 0.0
    %957 = vmatprep.subr.mxu0 0.0
    %958 = vmatpush1.msra.mxu0 0.0
    %959 = vmatprep.subr.mxu0 0.0
    %960 = vmatpush1.msra.mxu0 0.0
    %961 = vmatprep.mubr.f32.mxu0 0.0
    %962 = vmatmul.mubr.f32.gmra.mrb[0].mxu0 %v891
    %v963 = vpop.f32.mrb[0].mxu0
    %v964 = vadd.f32 0.0, %v963
    %v965 = vpop.f32.mrb[0].mxu0
    %966 = vdwg.mxu0
    %v968 = vsel %vm889, %v887, 0
    %970 = vmatprep.subr.mxu0 0.0
    %971 = vmatpush1.msra.mxu0 %v895
    %972 = vmatprep.subr.mxu0 0.0
    %973 = vmatpush1.msra.mxu0 0.0
    %974 = vmatprep.subr.mxu0 0.0
    %975 = vmatpush1.msra.mxu0 0.0
    %976 = vmatprep.subr.mxu0 0.0
    %977 = vmatpush1.msra.mxu0 0.0
    %978 = vmatprep.subr.mxu0 0.0
    %979 = vmatpush1.msra.mxu0 0.0
    %980 = vmatprep.subr.mxu0 0.0
    %981 = vmatpush1.msra.mxu0 0.0
    %982 = vmatprep.subr.mxu0 0.0
    %983 = vmatpush1.msra.mxu0 0.0
    %984 = vmatprep.subr.mxu0 0.0
    %985 = vmatpush1.msra.mxu0 0.0
    %986 = vmatprep.subr.mxu0 0.0
    %987 = vmatpush1.msra.mxu0 0.0
    %988 = vmatprep.subr.mxu0 0.0
    %989 = vmatpush1.msra.mxu0 0.0
    %990 = vmatprep.subr.mxu0 0.0
    %991 = vmatpush1.msra.mxu0 0.0
    %992 = vmatprep.subr.mxu0 0.0
    %993 = vmatpush1.msra.mxu0 0.0
    %994 = vmatprep.subr.mxu0 0.0
    %995 = vmatpush1.msra.mxu0 0.0
    %996 = vmatprep.subr.mxu0 0.0
    %997 = vmatpush1.msra.mxu0 0.0
    %998 = vmatprep.subr.mxu0 0.0
    %999 = vmatpush1.msra.mxu0 0.0
    %1000 = vmatprep.subr.mxu0 0.0
    %1001 = vmatpush1.msra.mxu0 0.0
    %1002 = vmatprep.subr.mxu0 0.0
    %1003 = vmatpush1.msra.mxu0 0.0
    %1004 = vmatprep.subr.mxu0 0.0
    %1005 = vmatpush1.msra.mxu0 0.0
    %1006 = vmatprep.subr.mxu0 0.0
    %1007 = vmatpush1.msra.mxu0 0.0
    %1008 = vmatprep.subr.mxu0 0.0
    %1009 = vmatpush1.msra.mxu0 0.0
    %1010 = vmatprep.subr.mxu0 0.0
    %1011 = vmatpush1.msra.mxu0 0.0
    %1012 = vmatprep.subr.mxu0 0.0
    %1013 = vmatpush1.msra.mxu0 0.0
    %1014 = vmatprep.subr.mxu0 0.0
    %1015 = vmatpush1.msra.mxu0 0.0
    %1016 = vmatprep.subr.mxu0 0.0
    %1017 = vmatpush1.msra.mxu0 0.0
    %1018 = vmatprep.subr.mxu0 0.0
    %1019 = vmatpush1.msra.mxu0 0.0
    %1020 = vmatprep.subr.mxu0 0.0
    %1021 = vmatpush1.msra.mxu0 0.0
    %1022 = vmatprep.subr.mxu0 0.0
    %1023 = vmatpush1.msra.mxu0 0.0
    %1024 = vmatprep.subr.mxu0 0.0
    %1025 = vmatpush1.msra.mxu0 0.0
    %1026 = vmatprep.subr.mxu0 0.0
    %1027 = vmatpush1.msra.mxu0 0.0
    %1028 = vmatprep.subr.mxu0 0.0
    %1029 = vmatpush1.msra.mxu0 0.0
    %1030 = vmatprep.subr.mxu0 0.0
    %1031 = vmatpush1.msra.mxu0 0.0
    %1032 = vmatprep.subr.mxu0 0.0
    %1033 = vmatpush1.msra.mxu0 0.0
    %1034 = vmatprep.mubr.f32.mxu0 0.0
    %1035 = vmatmul.mubr.f32.gmra.mrb[0].mxu0 %v968
    %v1036 = vpop.f32.mrb[0].mxu0
    %v1037 = vadd.f32 0.0, %v1036
    %v1038 = vpop.f32.mrb[0].mxu0
    %1039 = vdwg.mxu0
    %v1041 = vlaneseq
    %v1042 = vshrl.u32 %v1041, 7
    %v1043 = vsub.s32 0, %v1042
    %v1044 = vrot.slane %v127, %v1043
    %v1046 = vsub.f32 %v964, %v1044
    %v1047 = vld [vmem:[%s8] sm:$0xff]
    %v1048 = vld [vmem:[%s8 + $0x8] sm:$0xff]
    %v1050 = vsel %vm134, %v1046, 0
    %1052 = vmatprep.subr.mxu0 0.0
    %1053 = vmatpush1.msra.mxu0 %v1047
    %1054 = vmatprep.subr.mxu0 0.0
    %1055 = vmatpush1.msra.mxu0 %v1048
    %1056 = vmatprep.subr.mxu0 0.0
    %1057 = vmatpush1.msra.mxu0 0.0
    %1058 = vmatprep.subr.mxu0 0.0
    %1059 = vmatpush1.msra.mxu0 0.0
    %1060 = vmatprep.subr.mxu0 0.0
    %1061 = vmatpush1.msra.mxu0 0.0
    %1062 = vmatprep.subr.mxu0 0.0
    %1063 = vmatpush1.msra.mxu0 0.0
    %1064 = vmatprep.subr.mxu0 0.0
    %1065 = vmatpush1.msra.mxu0 0.0
    %1066 = vmatprep.subr.mxu0 0.0
    %1067 = vmatpush1.msra.mxu0 0.0
    %1068 = vmatprep.subr.mxu0 0.0
    %1069 = vmatpush1.msra.mxu0 0.0
    %1070 = vmatprep.subr.mxu0 0.0
    %1071 = vmatpush1.msra.mxu0 0.0
    %1072 = vmatprep.subr.mxu0 0.0
    %1073 = vmatpush1.msra.mxu0 0.0
    %1074 = vmatprep.subr.mxu0 0.0
    %1075 = vmatpush1.msra.mxu0 0.0
    %1076 = vmatprep.subr.mxu0 0.0
    %1077 = vmatpush1.msra.mxu0 0.0
    %1078 = vmatprep.subr.mxu0 0.0
    %1079 = vmatpush1.msra.mxu0 0.0
    %1080 = vmatprep.subr.mxu0 0.0
    %1081 = vmatpush1.msra.mxu0 0.0
    %1082 = vmatprep.subr.mxu0 0.0
    %1083 = vmatpush1.msra.mxu0 0.0
    %1084 = vmatprep.subr.mxu0 0.0
    %1085 = vmatpush1.msra.mxu0 0.0
    %1086 = vmatprep.subr.mxu0 0.0
    %1087 = vmatpush1.msra.mxu0 0.0
    %1088 = vmatprep.subr.mxu0 0.0
    %1089 = vmatpush1.msra.mxu0 0.0
    %1090 = vmatprep.subr.mxu0 0.0
    %1091 = vmatpush1.msra.mxu0 0.0
    %1092 = vmatprep.subr.mxu0 0.0
    %1093 = vmatpush1.msra.mxu0 0.0
    %1094 = vmatprep.subr.mxu0 0.0
    %1095 = vmatpush1.msra.mxu0 0.0
    %1096 = vmatprep.subr.mxu0 0.0
    %1097 = vmatpush1.msra.mxu0 0.0
    %1098 = vmatprep.subr.mxu0 0.0
    %1099 = vmatpush1.msra.mxu0 0.0
    %1100 = vmatprep.subr.mxu0 0.0
    %1101 = vmatpush1.msra.mxu0 0.0
    %1102 = vmatprep.subr.mxu0 0.0
    %1103 = vmatpush1.msra.mxu0 0.0
    %1104 = vmatprep.subr.mxu0 0.0
    %1105 = vmatpush1.msra.mxu0 0.0
    %1106 = vmatprep.subr.mxu0 0.0
    %1107 = vmatpush1.msra.mxu0 0.0
    %1108 = vmatprep.subr.mxu0 0.0
    %1109 = vmatpush1.msra.mxu0 0.0
    %1110 = vmatprep.subr.mxu0 0.0
    %1111 = vmatpush1.msra.mxu0 0.0
    %1112 = vmatprep.subr.mxu0 0.0
    %1113 = vmatpush1.msra.mxu0 0.0
    %1114 = vmatprep.subr.mxu0 0.0
    %1115 = vmatpush1.msra.mxu0 0.0
    %1116 = vmatprep.mubr.f32.mxu0 0.0
    %1117 = vmatmul.mubr.f32.gmra.mrb[0].mxu0 %v1050
    %v1118 = vpop.f32.mrb[0].mxu0
    %v1119 = vadd.f32 0.0, %v1118
    %v1120 = vpop.f32.mrb[0].mxu0
    %1121 = vdwg.mxu0
    %v1123 = vsel %vm134, %v1037, 0
    %1125 = vmatprep.subr.mxu0 0.0
    %1126 = vmatpush1.msra.mxu0 %v1047
    %1127 = vmatprep.subr.mxu0 0.0
    %1128 = vmatpush1.msra.mxu0 %v1048
    %1129 = vmatprep.subr.mxu0 0.0
    %1130 = vmatpush1.msra.mxu0 0.0
    %1131 = vmatprep.subr.mxu0 0.0
    %1132 = vmatpush1.msra.mxu0 0.0
    %1133 = vmatprep.subr.mxu0 0.0
    %1134 = vmatpush1.msra.mxu0 0.0
    %1135 = vmatprep.subr.mxu0 0.0
    %1136 = vmatpush1.msra.mxu0 0.0
    %1137 = vmatprep.subr.mxu0 0.0
    %1138 = vmatpush1.msra.mxu0 0.0
    %1139 = vmatprep.subr.mxu0 0.0
    %1140 = vmatpush1.msra.mxu0 0.0
    %1141 = vmatprep.subr.mxu0 0.0
    %1142 = vmatpush1.msra.mxu0 0.0
    %1143 = vmatprep.subr.mxu0 0.0
    %1144 = vmatpush1.msra.mxu0 0.0
    %1145 = vmatprep.subr.mxu0 0.0
    %1146 = vmatpush1.msra.mxu0 0.0
    %1147 = vmatprep.subr.mxu0 0.0
    %1148 = vmatpush1.msra.mxu0 0.0
    %1149 = vmatprep.subr.mxu0 0.0
    %1150 = vmatpush1.msra.mxu0 0.0
    %1151 = vmatprep.subr.mxu0 0.0
    %1152 = vmatpush1.msra.mxu0 0.0
    %1153 = vmatprep.subr.mxu0 0.0
    %1154 = vmatpush1.msra.mxu0 0.0
    %1155 = vmatprep.subr.mxu0 0.0
    %1156 = vmatpush1.msra.mxu0 0.0
    %1157 = vmatprep.subr.mxu0 0.0
    %1158 = vmatpush1.msra.mxu0 0.0
    %1159 = vmatprep.subr.mxu0 0.0
    %1160 = vmatpush1.msra.mxu0 0.0
    %1161 = vmatprep.subr.mxu0 0.0
    %1162 = vmatpush1.msra.mxu0 0.0
    %1163 = vmatprep.subr.mxu0 0.0
    %1164 = vmatpush1.msra.mxu0 0.0
    %1165 = vmatprep.subr.mxu0 0.0
    %1166 = vmatpush1.msra.mxu0 0.0
    %1167 = vmatprep.subr.mxu0 0.0
    %1168 = vmatpush1.msra.mxu0 0.0
    %1169 = vmatprep.subr.mxu0 0.0
    %1170 = vmatpush1.msra.mxu0 0.0
    %1171 = vmatprep.subr.mxu0 0.0
    %1172 = vmatpush1.msra.mxu0 0.0
    %1173 = vmatprep.subr.mxu0 0.0
    %1174 = vmatpush1.msra.mxu0 0.0
    %1175 = vmatprep.subr.mxu0 0.0
    %1176 = vmatpush1.msra.mxu0 0.0
    %1177 = vmatprep.subr.mxu0 0.0
    %1178 = vmatpush1.msra.mxu0 0.0
    %1179 = vmatprep.subr.mxu0 0.0
    %1180 = vmatpush1.msra.mxu0 0.0
    %1181 = vmatprep.subr.mxu0 0.0
    %1182 = vmatpush1.msra.mxu0 0.0
    %1183 = vmatprep.subr.mxu0 0.0
    %1184 = vmatpush1.msra.mxu0 0.0
    %1185 = vmatprep.subr.mxu0 0.0
    %1186 = vmatpush1.msra.mxu0 0.0
    %1187 = vmatprep.subr.mxu0 0.0
    %1188 = vmatpush1.msra.mxu0 0.0
    %1189 = vmatprep.mubr.f32.mxu0 0.0
    %1190 = vmatmul.mubr.f32.gmra.mrb[0].mxu0 %v1123
    %v1191 = vpop.f32.mrb[0].mxu0
    %v1192 = vadd.f32 0.0, %v1191
    %v1193 = vpop.f32.mrb[0].mxu0
    %1194 = vdwg.mxu0
    %v1195 = vsub.f32 %v1119, %v1044
    %v1197 = vsel %vm134, %v1192, 0
    %1199 = vmatprep.subr.mxu0 0.0
    %1200 = vmatpush1.msra.mxu0 %v123
    %1201 = vmatprep.subr.mxu0 0.0
    %1202 = vmatpush1.msra.mxu0 %v124
    %1203 = vmatprep.subr.mxu0 0.0
    %1204 = vmatpush1.msra.mxu0 0.0
    %1205 = vmatprep.subr.mxu0 0.0
    %1206 = vmatpush1.msra.mxu0 0.0
    %1207 = vmatprep.subr.mxu0 0.0
    %1208 = vmatpush1.msra.mxu0 0.0
    %1209 = vmatprep.subr.mxu0 0.0
    %1210 = vmatpush1.msra.mxu0 0.0
    %1211 = vmatprep.subr.mxu0 0.0
    %1212 = vmatpush1.msra.mxu0 0.0
    %1213 = vmatprep.subr.mxu0 0.0
    %1214 = vmatpush1.msra.mxu0 0.0
    %1215 = vmatprep.subr.mxu0 0.0
    %1216 = vmatpush1.msra.mxu0 0.0
    %1217 = vmatprep.subr.mxu0 0.0
    %1218 = vmatpush1.msra.mxu0 0.0
    %1219 = vmatprep.subr.mxu0 0.0
    %1220 = vmatpush1.msra.mxu0 0.0
    %1221 = vmatprep.subr.mxu0 0.0
    %1222 = vmatpush1.msra.mxu0 0.0
    %1223 = vmatprep.subr.mxu0 0.0
    %1224 = vmatpush1.msra.mxu0 0.0
    %1225 = vmatprep.subr.mxu0 0.0
    %1226 = vmatpush1.msra.mxu0 0.0
    %1227 = vmatprep.subr.mxu0 0.0
    %1228 = vmatpush1.msra.mxu0 0.0
    %1229 = vmatprep.subr.mxu0 0.0
    %1230 = vmatpush1.msra.mxu0 0.0
    %1231 = vmatprep.subr.mxu0 0.0
    %1232 = vmatpush1.msra.mxu0 0.0
    %1233 = vmatprep.subr.mxu0 0.0
    %1234 = vmatpush1.msra.mxu0 0.0
    %1235 = vmatprep.subr.mxu0 0.0
    %1236 = vmatpush1.msra.mxu0 0.0
    %1237 = vmatprep.subr.mxu0 0.0
    %1238 = vmatpush1.msra.mxu0 0.0
    %1239 = vmatprep.subr.mxu0 0.0
    %1240 = vmatpush1.msra.mxu0 0.0
    %1241 = vmatprep.subr.mxu0 0.0
    %1242 = vmatpush1.msra.mxu0 0.0
    %1243 = vmatprep.subr.mxu0 0.0
    %1244 = vmatpush1.msra.mxu0 0.0
    %1245 = vmatprep.subr.mxu0 0.0
    %1246 = vmatpush1.msra.mxu0 0.0
    %1247 = vmatprep.subr.mxu0 0.0
    %1248 = vmatpush1.msra.mxu0 0.0
    %1249 = vmatprep.subr.mxu0 0.0
    %1250 = vmatpush1.msra.mxu0 0.0
    %1251 = vmatprep.subr.mxu0 0.0
    %1252 = vmatpush1.msra.mxu0 0.0
    %1253 = vmatprep.subr.mxu0 0.0
    %1254 = vmatpush1.msra.mxu0 0.0
    %1255 = vmatprep.subr.mxu0 0.0
    %1256 = vmatpush1.msra.mxu0 0.0
    %1257 = vmatprep.subr.mxu0 0.0
    %1258 = vmatpush1.msra.mxu0 0.0
    %1259 = vmatprep.subr.mxu0 0.0
    %1260 = vmatpush1.msra.mxu0 0.0
    %1261 = vmatprep.subr.mxu0 0.0
    %1262 = vmatpush1.msra.mxu0 0.0
    %1263 = vmatprep.mubr.f32.mxu0 0.0
    %1264 = vmatmul.mubr.f32.gmra.mrb[0].mxu0 %v1197
    %v1265 = vpop.f32.mrb[0].mxu0
    %v1266 = vadd.f32 0.0, %v1265
    %v1267 = vpop.f32.mrb[0].mxu0
    %1268 = vdwg.mxu0
    %v1270 = vsel %vm134, %v1195, 0
    %1272 = vmatprep.subr.mxu0 0.0
    %1273 = vmatpush1.msra.mxu0 %v123
    %1274 = vmatprep.subr.mxu0 0.0
    %1275 = vmatpush1.msra.mxu0 %v124
    %1276 = vmatprep.subr.mxu0 0.0
    %1277 = vmatpush1.msra.mxu0 0.0
    %1278 = vmatprep.subr.mxu0 0.0
    %1279 = vmatpush1.msra.mxu0 0.0
    %1280 = vmatprep.subr.mxu0 0.0
    %1281 = vmatpush1.msra.mxu0 0.0
    %1282 = vmatprep.subr.mxu0 0.0
    %1283 = vmatpush1.msra.mxu0 0.0
    %1284 = vmatprep.subr.mxu0 0.0
    %1285 = vmatpush1.msra.mxu0 0.0
    %1286 = vmatprep.subr.mxu0 0.0
    %1287 = vmatpush1.msra.mxu0 0.0
    %1288 = vmatprep.subr.mxu0 0.0
    %1289 = vmatpush1.msra.mxu0 0.0
    %1290 = vmatprep.subr.mxu0 0.0
    %1291 = vmatpush1.msra.mxu0 0.0
    %1292 = vmatprep.subr.mxu0 0.0
    %1293 = vmatpush1.msra.mxu0 0.0
    %1294 = vmatprep.subr.mxu0 0.0
    %1295 = vmatpush1.msra.mxu0 0.0
    %1296 = vmatprep.subr.mxu0 0.0
    %1297 = vmatpush1.msra.mxu0 0.0
    %1298 = vmatprep.subr.mxu0 0.0
    %1299 = vmatpush1.msra.mxu0 0.0
    %1300 = vmatprep.subr.mxu0 0.0
    %1301 = vmatpush1.msra.mxu0 0.0
    %1302 = vmatprep.subr.mxu0 0.0
    %1303 = vmatpush1.msra.mxu0 0.0
    %1304 = vmatprep.subr.mxu0 0.0
    %1305 = vmatpush1.msra.mxu0 0.0
    %1306 = vmatprep.subr.mxu0 0.0
    %1307 = vmatpush1.msra.mxu0 0.0
    %1308 = vmatprep.subr.mxu0 0.0
    %1309 = vmatpush1.msra.mxu0 0.0
    %1310 = vmatprep.subr.mxu0 0.0
    %1311 = vmatpush1.msra.mxu0 0.0
    %1312 = vmatprep.subr.mxu0 0.0
    %1313 = vmatpush1.msra.mxu0 0.0
    %1314 = vmatprep.subr.mxu0 0.0
    %1315 = vmatpush1.msra.mxu0 0.0
    %1316 = vmatprep.subr.mxu0 0.0
    %1317 = vmatpush1.msra.mxu0 0.0
    %1318 = vmatprep.subr.mxu0 0.0
    %1319 = vmatpush1.msra.mxu0 0.0
    %1320 = vmatprep.subr.mxu0 0.0
    %1321 = vmatpush1.msra.mxu0 0.0
    %1322 = vmatprep.subr.mxu0 0.0
    %1323 = vmatpush1.msra.mxu0 0.0
    %1324 = vmatprep.subr.mxu0 0.0
    %1325 = vmatpush1.msra.mxu0 0.0
    %1326 = vmatprep.subr.mxu0 0.0
    %1327 = vmatpush1.msra.mxu0 0.0
    %1328 = vmatprep.subr.mxu0 0.0
    %1329 = vmatpush1.msra.mxu0 0.0
    %1330 = vmatprep.subr.mxu0 0.0
    %1331 = vmatpush1.msra.mxu0 0.0
    %1332 = vmatprep.subr.mxu0 0.0
    %1333 = vmatpush1.msra.mxu0 0.0
    %1334 = vmatprep.subr.mxu0 0.0
    %1335 = vmatpush1.msra.mxu0 0.0
    %1336 = vmatprep.mubr.f32.mxu0 0.0
    %1337 = vmatmul.mubr.f32.gmra.mrb[0].mxu0 %v1270
    %v1338 = vpop.f32.mrb[0].mxu0
    %v1339 = vadd.f32 %v212, %v1338
    %v1340 = vpop.f32.mrb[0].mxu0
    %1341 = vdwg.mxu0
    %v1342 = vmax.f32 %v1339, 0.0
    %v1343 = vxor.u32 %v1342, 2147483648
    %v1344 = vmul.f32 %v1343, 1.442695
    %v1345 = vpow.pop %v1344
    %v1346 = vadd.f32 %v1345, 1.0
    %v1347 = vrcp.pop %v1346
    %v1348 = vmul.f32 1.0, %v1347
    %vm1349 = vcmask 123904
    %1350 = vst.msk [vmem:[#allocation13] sm:$0x3] %vm1349, %v1348
    %v1351 = vxor.u32 %v1266, 2147483648
    %v1352 = vmul.f32 %v1351, 1.442695
    %v1353 = vpow.pop %v1352
    %v1354 = vadd.f32 %v1353, 1.0
    %v1355 = vrcp.pop %v1354
    %v1356 = vmul.f32 1.0, %v1355
    %1357 = vst.msk [vmem:[#allocation14] sm:$0x3] %vm1349, %v1356
    // Predicated region
    $region74: #{forward.1} parent=1 // pred_check
      _
    $region75: #{forward.1} parent=1 // pred_check_branch
      %1359 = sbr.rel (0) target = $region77
    $region76: #{forward.1} parent=1 // pred_region
      %s1361 = ssub.s32 32, 32
      %1362 = vsyncadd [#allocation4], %s1361
      %s1364 = sshll.u32 [#allocation13], 4
      %s1365 = int_to_ptr.vmem [resolvable:$true] %s1364
      %1367 = dma.vmem_to_hbm [thread:$0]  %s1365, 32, %s12, [#allocation4]
    $region77: #{forward.1} parent=1 // pred_fallthru
      _
    // Predicated region
    $region78: #{forward.1} parent=1 // pred_check
      _
    $region79: #{forward.1} parent=1 // pred_check_branch
      %1369 = sbr.rel (0) target = $region81
    $region80: #{forward.1} parent=1 // pred_region
      %s1371 = ssub.s32 32, 32
      %1372 = vsyncadd [#allocation15], %s1371
      %s1374 = sshll.u32 [#allocation14], 4
      %s1375 = int_to_ptr.vmem [resolvable:$true] %s1374
      %1377 = dma.vmem_to_hbm [thread:$0]  %s1375, 32, %s13, [#allocation15]
    $region81: #{forward.1} parent=1 // pred_fallthru
      _
    // Predicated region
    $region82: #{forward.1} parent=1 // pred_check
      _
    $region83: #{forward.1} parent=1 // pred_check_branch
      %1379 = sbr.rel (0) target = $region85
    $region84: #{forward.1} parent=1 // pred_region
      %1380 = dma.done [#allocation4], 32
    $region85: #{forward.1} parent=1 // pred_fallthru
      _
    // Predicated region
    $region86: #{forward.1} parent=1 // pred_check
      _
    $region87: #{forward.1} parent=1 // pred_check_branch
      %1382 = sbr.rel (0) target = $region89
    $region88: #{forward.1} parent=1 // pred_region
      %1383 = dma.done [#allocation15], 32
    $region89: #{forward.1} parent=1 // pred_fallthru
      _
    %1384 = vsyncpa [#allocation3], 1
    %1385 = vsyncpa [#allocation6], 1
    %1386 = vsyncpa [#allocation9], 1
    %1387 = vsyncpa [#allocation12], 1
    %1388 = vsyncpa [#allocation4], 1
    %1389 = vsyncpa [#allocation15], 1

</llo_original>
